<compile_context>
chip_gen: v6e
topology: v6e:2x2x1
jax: 0.10.0
libtpu: 0.0.40
codegen_flags: <defaults>
</compile_context>

<pallas_src>
import functools
import math

import jax
import jax.numpy as jnp
from jax.experimental import pallas as pl
from jax.experimental.pallas import tpu as pltpu

EPS = 1e-5
LANE_TILE = 512                    # max tile along flattened-spatial (lane) axis
VMEM_LIMIT = 32 * 1024 * 1024      # safe on v5e / v6e / v7x scoped budgets

_VMEM = pl.BlockSpec(memory_space=pltpu.MemorySpace.VMEM)


def _choose_tile(s):
    """(tile, padded_extent) for the flattened spatial axis (lane axis)."""
    if s <= LANE_TILE:
        return s, s
    n_tiles = -(-s // LANE_TILE)
    return LANE_TILE, n_tiles * LANE_TILE


# --------------------------------------------------------------------------
# Pallas kernels
# --------------------------------------------------------------------------
def _conv_relu(p_ref, w_ref, b_ref, s_total, s_tile):
    """GEMM + bias + ReLU for one (image, spatial-tile) block.

    p_ref: [1, K, s_tile] bf16   im2col patches (K = kh*kw*Cin)
    w_ref: [Cout, K]      bf16   conv weight   (constant block, stays resident)
    b_ref: [Cout, 1]      f32    conv bias     (constant block)
    Returns y [Cout, s_tile] f32 and a copy with padded lanes zeroed.
    """
    s = pl.program_id(1)
    y = jnp.dot(w_ref[...], p_ref[0], preferred_element_type=jnp.float32)
    y = jnp.maximum(y + b_ref[...], 0.0)                       # bias + ReLU (f32)
    lane = jax.lax.broadcasted_iota(jnp.int32, y.shape, 1)
    valid = lane < (s_total - s * s_tile)                      # mask spatial pad
    return y, jnp.where(valid, y, 0.0)


def conv_store_kernel(p_ref, w_ref, b_ref, y_ref, st_ref, *, s_total, s_tile):
    """conv + ReLU, write activation + per-tile BN partial (sum, sumsq)."""
    y, ym = _conv_relu(p_ref, w_ref, b_ref, s_total, s_tile)
    y_ref[0] = y
    psum = jnp.sum(ym, axis=1, keepdims=True)                  # [Cout, 1]
    psq = jnp.sum(ym * ym, axis=1, keepdims=True)              # [Cout, 1]
    st_ref[...] = jnp.concatenate([psum, psq], axis=1)[None, None]


def conv_nostore_kernel(p_ref, w_ref, b_ref, st_ref, *, s_total, s_tile):
    """conv + ReLU, emit only the per-tile (sum, sumsq) partials.

    Used for stage 2: BN2, global-average-pool and the Linear head only need
    per-channel / per-image sums, so the full activation is never written.
    """
    _, ym = _conv_relu(p_ref, w_ref, b_ref, s_total, s_tile)
    psum = jnp.sum(ym, axis=1, keepdims=True)
    psq = jnp.sum(ym * ym, axis=1, keepdims=True)
    st_ref[...] = jnp.concatenate([psum, psq], axis=1)[None, None]


def bn_apply_kernel(y_ref, sc_ref, sh_ref, o_ref):
    """Per-channel affine (BN apply) on a [1, C, s_tile] block; bf16 out."""
    o_ref[0] = (y_ref[0] * sc_ref[...] + sh_ref[...]).astype(o_ref.dtype)


def head_kernel(pool_ref, sc_ref, sh_ref, wl_ref, bl_ref, o_ref):
    """BN2 affine on pooled features + Linear(32 -> out). All tiny, one block."""
    pooled_bn = pool_ref[...] * sc_ref[...] + sh_ref[...]
    o_ref[...] = (
        jnp.dot(pooled_bn, wl_ref[...], preferred_element_type=jnp.float32)
        + bl_ref[...])


# --------------------------------------------------------------------------
# pallas_call wrappers
# --------------------------------------------------------------------------
def conv_stage(patches, wmat, bias, *, s_total, s_tile, store_y):
    n, k, s_pad = patches.shape
    cout = wmat.shape[0]
    s_tiles = s_pad // s_tile
    grid = (n, s_tiles)
    in_specs = [
        pl.BlockSpec((1, k, s_tile), lambda ni, si: (ni, 0, si)),   # patches tile
        pl.BlockSpec((cout, k), lambda ni, si: (0, 0)),             # weight (resident)
        pl.BlockSpec((cout, 1), lambda ni, si: (0, 0)),             # bias   (resident)
    ]
    stats_spec = pl.BlockSpec((1, 1, cout, 2), lambda ni, si: (ni, si, 0, 0))
    stats_shape = jax.ShapeDtypeStruct((n, s_tiles, cout, 2), jnp.float32)
    cp = pltpu.CompilerParams(
        dimension_semantics=("parallel", "arbitrary"),
        vmem_limit_bytes=VMEM_LIMIT)
    if store_y:
        kern = functools.partial(conv_store_kernel, s_total=s_total, s_tile=s_tile)
        y_spec = pl.BlockSpec((1, cout, s_tile), lambda ni, si: (ni, 0, si))
        y_shape = jax.ShapeDtypeStruct((n, cout, s_pad), jnp.float32)
        return pl.pallas_call(
            kern, grid=grid, in_specs=in_specs,
            out_specs=(y_spec, stats_spec), out_shape=(y_shape, stats_shape),
            compiler_params=cp)(patches, wmat, bias)
    kern = functools.partial(conv_nostore_kernel, s_total=s_total, s_tile=s_tile)
    return pl.pallas_call(
        kern, grid=grid, in_specs=in_specs,
        out_specs=stats_spec, out_shape=stats_shape,
        compiler_params=cp)(patches, wmat, bias)


def bn_apply(y, scale, shift, s_tile):
    n, c, s_pad = y.shape
    grid = (n, s_pad // s_tile)
    return pl.pallas_call(
        bn_apply_kernel, grid=grid,
        in_specs=[pl.BlockSpec((1, c, s_tile), lambda ni, si: (ni, 0, si)),
                  pl.BlockSpec((c, 1), lambda ni, si: (0, 0)),
                  pl.BlockSpec((c, 1), lambda ni, si: (0, 0))],
        out_specs=pl.BlockSpec((1, c, s_tile), lambda ni, si: (ni, 0, si)),
        out_shape=jax.ShapeDtypeStruct((n, c, s_pad), jnp.bfloat16),
        compiler_params=pltpu.CompilerParams(
            dimension_semantics=("parallel", "arbitrary"),
            vmem_limit_bytes=VMEM_LIMIT),
    )(y, scale.reshape(-1, 1).astype(jnp.float32),
      shift.reshape(-1, 1).astype(jnp.float32))


def head(pooled, scale, shift, wl_t, bias):
    n = pooled.shape[0]
    out = wl_t.shape[1]
    return pl.pallas_call(
        head_kernel,
        in_specs=[_VMEM] * 5, out_specs=_VMEM,
        out_shape=jax.ShapeDtypeStruct((n, out), jnp.float32),
    )(pooled, scale.reshape(1, -1), shift.reshape(1, -1), wl_t,
      bias.reshape(1, -1))


# --------------------------------------------------------------------------
# JAX glue: im2col, BN stat reduction, params
# --------------------------------------------------------------------------
def im2col_nchw(x, k, stride, pad):
    """x [N, C, H, W] -> (patches [N, k*k*C, Ho*Wo], Ho, Wo); K-order (kh,kw,c).

    # TODO(synk): fuse this strided patch gather into the conv kernel (in-kernel
    # im2col) to remove the k*k HBM inflation entirely; bf16 patches halve it
    # for now.
    """
    n, c, h, w = x.shape
    xp = jnp.pad(x, ((0, 0), (0, 0), (pad, pad), (pad, pad)))
    ho = (h + 2 * pad - k) // stride + 1
    wo = (w + 2 * pad - k) // stride + 1
    cols = []
    for di in range(k):
        for dj in range(k):
            cols.append(
                xp[:, :, di:di + ho * stride:stride, dj:dj + wo * stride:stride])
    patches = jnp.stack(cols, axis=1)                  # [N, k*k, C, Ho, Wo]
    return patches.reshape(n, k * k * c, ho * wo), ho, wo


def bn_affine_from_stats(stats, gamma, beta, count):
    """Per-tile partials [N, S_tiles, C, 2] -> exact per-channel scale/shift."""
    tot = jnp.sum(stats, axis=(0, 1))                  # [C, 2]
    mean = tot[:, 0] / count
    var = jnp.maximum(tot[:, 1] / count - mean * mean, 0.0)   # clamp fp round-off
    scale = gamma * jax.lax.rsqrt(var + EPS)
    shift = beta - mean * scale
    return scale, shift


def _conv_wmat(w):
    """torch conv weight [Cout, Cin, kh, kw] -> [Cout, kh*kw*Cin] bf16."""
    cout = w.shape[0]
    return jnp.transpose(w, (0, 2, 3, 1)).reshape(cout, -1).astype(jnp.bfloat16)


def init_params(key, in_channels=1, out_channels=2):
    k1, k2, k3, k4, k5 = jax.random.split(key, 5)
    # Conv2d: kaiming_normal_ (fan_in, gain=sqrt(2)); bias = 0
    w1 = jax.random.normal(k1, (16, in_channels, 7, 7), jnp.float32) * math.sqrt(
        2.0 / (in_channels * 7 * 7))
    b1 = jnp.zeros((16,), jnp.float32)
    w2 = jax.random.normal(k2, (32, 16, 5, 5), jnp.float32) * math.sqrt(
        2.0 / (16 * 5 * 5))
    b2 = jnp.zeros((32,), jnp.float32)
    # Linear: normal(0,1) weight, 0 bias (per module's init_weights)
    wl = jax.random.normal(k3, (out_channels, 32), jnp.float32)
    bl = jnp.zeros((out_channels,), jnp.float32)
    # BatchNorm: gamma ~ N(0,1) (per init_weights), beta = 0 (torch default)
    g1 = jax.random.normal(k4, (16,), jnp.float32)
    be1 = jnp.zeros((16,), jnp.float32)
    g2 = jax.random.normal(k5, (32,), jnp.float32)
    be2 = jnp.zeros((32,), jnp.float32)
    return dict(w1=w1, b1=b1, w2=w2, b2=b2, wl=wl, bl=bl,
                g1=g1, be1=be1, g2=g2, be2=be2)


# --------------------------------------------------------------------------
# Forward pass (matches torch: norm1(relu(conv1)) -> norm2(relu(conv2)) ->
# avgpool -> linear; BatchNorm uses training-mode batch statistics)
# --------------------------------------------------------------------------
def contrastive_forward(x_nchw, p):
    n = x_nchw.shape[0]
    x = x_nchw.astype(jnp.bfloat16)

    # ---- stage 1: conv1(7x7, s2, p3) + ReLU + BN1 ----
    patches1, h1, w1 = im2col_nchw(x, k=7, stride=2, pad=3)
    s1 = h1 * w1
    t1, s1p = _choose_tile(s1)
    if s1p != s1:
        patches1 = jnp.pad(patches1, ((0, 0), (0, 0), (0, s1p - s1)))
    y1, stats1 = conv_stage(patches1, _conv_wmat(p["w1"]), p["b1"].reshape(-1, 1),
                            s_total=s1, s_tile=t1, store_y=True)
    scale1, shift1 = bn_affine_from_stats(stats1, p["g1"], p["be1"], n * s1)
    y1bn = bn_apply(y1, scale1, shift1, t1)                 # [N, 16, s1p] bf16
    y1bn = y1bn[:, :, :s1].reshape(n, 16, h1, w1)

    # ---- stage 2: conv2(5x5, s2, p2) + ReLU + BN2 (stats only) ----
    patches2, h2, w2 = im2col_nchw(y1bn, k=5, stride=2, pad=2)
    s2 = h2 * w2
    t2, s2p = _choose_tile(s2)
    if s2p != s2:
        patches2 = jnp.pad(patches2, ((0, 0), (0, 0), (0, s2p - s2)))
    stats2 = conv_stage(patches2, _conv_wmat(p["w2"]), p["b2"].reshape(-1, 1),
                        s_total=s2, s_tile=t2, store_y=False)
    scale2, shift2 = bn_affine_from_stats(stats2, p["g2"], p["be2"], n * s2)

    # ---- stage 3: AdaptiveAvgPool2d((1,1)) + Linear ----
    # BN2 is per-channel affine, so it commutes with the per-image spatial mean:
    # pooling the pre-BN per-image sums and applying (scale2, shift2) afterwards
    # is exact.  The full [N, 32, H2*W2] activation is never written to HBM.
    pooled = jnp.sum(stats2[:, :, :, 0], axis=1) / s2       # [N, 32]
    return head(pooled, scale2, shift2,
                jnp.transpose(p["wl"]).astype(jnp.float32), p["bl"])


if __name__ == "__main__":
    key = jax.random.PRNGKey(0)
    k_x, k_p = jax.random.split(key)
    x = jax.random.normal(k_x, (2, 1, 16, 16), jnp.float32)   # NCHW, in_channels=1
    params = init_params(k_p, in_channels=1, out_channels=2)

    fwd = jax.jit(contrastive_forward)
    out = fwd(x, params)
    jax.block_until_ready(out)
    assert out.shape == (2, 2) and out.dtype == jnp.float32
    print("KERNEL_OK")
</pallas_src>

<mosaic_0001>
module attributes {stable_mosaic.version = 11 : i64} {
  func.func @conv_store_kernel(%arg0: i32, %arg1: i32, %arg2: memref<1x49x64xbf16, #tpu.memory_space<vmem>>, %arg3: memref<16x49xbf16, #tpu.memory_space<vmem>>, %arg4: memref<16x1xf32, #tpu.memory_space<vmem>>, %arg5: memref<1x16x64xf32, #tpu.memory_space<vmem>>, %arg6: memref<1x1x16x2xf32, #tpu.memory_space<vmem>>) attributes {dimension_semantics = [#tpu.dimension_semantics<parallel>, #tpu.dimension_semantics<arbitrary>], iteration_bounds = array<i64: 2, 1>, scalar_prefetch = 0 : i64, scratch_operands = 0 : i64, tpu.core_type = #tpu.core_type<tc>, window_params = [{transform_indices = @transform_0, window_bounds = array<i64: 1, 49, 64>}, {pipeline_mode = #tpu.pipeline_mode<synchronous>, transform_indices = @transform_1, window_bounds = array<i64: 16, 49>}, {pipeline_mode = #tpu.pipeline_mode<synchronous>, transform_indices = @transform_2, window_bounds = array<i64: 16, 1>}, {transform_indices = @transform_3, window_bounds = array<i64: 1, 16, 64>}, {transform_indices = @transform_4, window_bounds = array<i64: 1, 1, 16, 2>}]} {
    %c0 = arith.constant 0 : index
    %c0_0 = arith.constant 0 : index
    %0 = vector.load %arg3[%c0, %c0_0] : memref<16x49xbf16, #tpu.memory_space<vmem>>, vector<16x49xbf16>
    %c0_1 = arith.constant 0 : index
    %c0_2 = arith.constant 0 : index
    %c0_3 = arith.constant 0 : index
    %1 = vector.load %arg2[%c0_1, %c0_2, %c0_3] : memref<1x49x64xbf16, #tpu.memory_space<vmem>>, vector<1x49x64xbf16>
    %2 = vector.shape_cast %1 : vector<1x49x64xbf16> to vector<49x64xbf16>
    %cst = arith.constant dense<0.000000e+00> : vector<16x64xf32>
    %3 = tpu.matmul %0, %2, %cst {dimension_numbers = #tpu.dot_dimension_numbers<[1], [0], [0], [1], [0, 0, 1, 1], [], []>} : vector<16x49xbf16>, vector<49x64xbf16>, vector<16x64xf32> -> vector<16x64xf32>
    %c0_4 = arith.constant 0 : index
    %c0_5 = arith.constant 0 : index
    %4 = vector.load %arg4[%c0_4, %c0_5] : memref<16x1xf32, #tpu.memory_space<vmem>>, vector<16x1xf32>
    %5 = vector.broadcast %4 : vector<16x1xf32> to vector<16x64xf32>
    %6 = arith.addf %3, %5 : vector<16x64xf32>
    %cst_6 = arith.constant 0.000000e+00 : f32
    %7 = vector.broadcast %cst_6 : f32 to vector<16x64xf32>
    %8 = arith.maximumf %6, %7 : vector<16x64xf32>
    %9 = tpu.iota {dimensions = array<i32: 1>} : vector<16x64xi32>
    %c64_i32 = arith.constant 64 : i32
    %10 = arith.muli %arg1, %c64_i32 : i32
    %c64_i32_7 = arith.constant 64 : i32
    %11 = arith.subi %c64_i32_7, %10 : i32
    %12 = vector.broadcast %11 : i32 to vector<16x64xi32>
    %13 = arith.cmpi slt, %9, %12 : vector<16x64xi32>
    %cst_8 = arith.constant 0.000000e+00 : f32
    %14 = vector.broadcast %cst_8 : f32 to vector<16x64xf32>
    %15 = arith.select %13, %8, %14 : vector<16x64xi1>, vector<16x64xf32>
    %c0_9 = arith.constant 0 : index
    %c0_10 = arith.constant 0 : index
    %c0_11 = arith.constant 0 : index
    %16 = vector.load %arg5[%c0_9, %c0_10, %c0_11] : memref<1x16x64xf32, #tpu.memory_space<vmem>>, vector<1x16x64xf32>
    %17 = vector.shape_cast %16 : vector<1x16x64xf32> to vector<16x64xf32>
    %18 = vector.shape_cast %8 : vector<16x64xf32> to vector<1x16x64xf32>
    tpu.vector_store %arg5[%c0_9, %c0_10, %c0_11], %18 {strides = array<i32>} : memref<1x16x64xf32, #tpu.memory_space<vmem>>, vector<1x16x64xf32>,
    %cst_12 = arith.constant dense<0.000000e+00> : vector<16xf32>
    %19 = vector.multi_reduction <add>, %15, %cst_12 [1] : vector<16x64xf32> to vector<16xf32>
    %20 = vector.shape_cast %19 : vector<16xf32> to vector<16x1xf32>
    %21 = arith.mulf %15, %15 : vector<16x64xf32>
    %cst_13 = arith.constant dense<0.000000e+00> : vector<16xf32>
    %22 = vector.multi_reduction <add>, %21, %cst_13 [1] : vector<16x64xf32> to vector<16xf32>
    %23 = vector.shape_cast %22 : vector<16xf32> to vector<16x1xf32>
    %24 = tpu.concatenate %20, %23 in 1 : vector<16x1xf32>, vector<16x1xf32> -> vector<16x2xf32>
    %25 = vector.shape_cast %24 : vector<16x2xf32> to vector<1x1x16x2xf32>
    %c0_14 = arith.constant 0 : index
    %c0_15 = arith.constant 0 : index
    %c0_16 = arith.constant 0 : index
    %c0_17 = arith.constant 0 : index
    %26 = vector.load %arg6[%c0_14, %c0_15, %c0_16, %c0_17] : memref<1x1x16x2xf32, #tpu.memory_space<vmem>>, vector<1x1x16x2xf32>
    tpu.vector_store %arg6[%c0_14, %c0_15, %c0_16, %c0_17], %25 {strides = array<i32>} : memref<1x1x16x2xf32, #tpu.memory_space<vmem>>, vector<1x1x16x2xf32>,
    return
  }
  func.func @transform_0(%arg0: i32, %arg1: i32) -> (i32, i32, i32) {
    %c0_i32 = arith.constant 0 : i32
    %c0_i32_0 = arith.constant 0 : i32
    return %arg0, %c0_i32, %arg1 : i32, i32, i32
  }
  func.func @transform_1(%arg0: i32, %arg1: i32) -> (i32, i32) {
    %c0_i32 = arith.constant 0 : i32
    %c0_i32_0 = arith.constant 0 : i32
    %c0_i32_1 = arith.constant 0 : i32
    return %c0_i32, %c0_i32_0 : i32, i32
  }
  func.func @transform_2(%arg0: i32, %arg1: i32) -> (i32, i32) {
    %c0_i32 = arith.constant 0 : i32
    %c0_i32_0 = arith.constant 0 : i32
    %c0_i32_1 = arith.constant 0 : i32
    return %c0_i32, %c0_i32_0 : i32, i32
  }
  func.func @transform_3(%arg0: i32, %arg1: i32) -> (i32, i32, i32) {
    %c0_i32 = arith.constant 0 : i32
    %c0_i32_0 = arith.constant 0 : i32
    return %arg0, %c0_i32, %arg1 : i32, i32, i32
  }
  func.func @transform_4(%arg0: i32, %arg1: i32) -> (i32, i32, i32, i32) {
    %c0_i32 = arith.constant 0 : i32
    %c0_i32_0 = arith.constant 0 : i32
    %c0_i32_1 = arith.constant 0 : i32
    return %arg0, %arg1, %c0_i32, %c0_i32_0 : i32, i32, i32, i32
  }
}

module attributes {stable_mosaic.version = 11 : i64} {
  func.func @bn_apply_kernel(%arg0: i32, %arg1: i32, %arg2: memref<1x16x64xf32, #tpu.memory_space<vmem>>, %arg3: memref<16x1xf32, #tpu.memory_space<vmem>>, %arg4: memref<16x1xf32, #tpu.memory_space<vmem>>, %arg5: memref<1x16x64xbf16, #tpu.memory_space<vmem>>) attributes {dimension_semantics = [#tpu.dimension_semantics<parallel>, #tpu.dimension_semantics<arbitrary>], iteration_bounds = array<i64: 2, 1>, scalar_prefetch = 0 : i64, scratch_operands = 0 : i64, tpu.core_type = #tpu.core_type<tc>, window_params = [{transform_indices = @transform_0, window_bounds = array<i64: 1, 16, 64>}, {pipeline_mode = #tpu.pipeline_mode<synchronous>, transform_indices = @transform_1, window_bounds = array<i64: 16, 1>}, {pipeline_mode = #tpu.pipeline_mode<synchronous>, transform_indices = @transform_2, window_bounds = array<i64: 16, 1>}, {transform_indices = @transform_3, window_bounds = array<i64: 1, 16, 64>}]} {
    %c0 = arith.constant 0 : index
    %c0_0 = arith.constant 0 : index
    %c0_1 = arith.constant 0 : index
    %0 = vector.load %arg2[%c0, %c0_0, %c0_1] : memref<1x16x64xf32, #tpu.memory_space<vmem>>, vector<1x16x64xf32>
    %1 = vector.shape_cast %0 : vector<1x16x64xf32> to vector<16x64xf32>
    %c0_2 = arith.constant 0 : index
    %c0_3 = arith.constant 0 : index
    %2 = vector.load %arg3[%c0_2, %c0_3] : memref<16x1xf32, #tpu.memory_space<vmem>>, vector<16x1xf32>
    %3 = vector.broadcast %2 : vector<16x1xf32> to vector<16x64xf32>
    %4 = arith.mulf %1, %3 : vector<16x64xf32>
    %c0_4 = arith.constant 0 : index
    %c0_5 = arith.constant 0 : index
    %5 = vector.load %arg4[%c0_4, %c0_5] : memref<16x1xf32, #tpu.memory_space<vmem>>, vector<16x1xf32>
    %6 = vector.broadcast %5 : vector<16x1xf32> to vector<16x64xf32>
    %7 = arith.addf %4, %6 : vector<16x64xf32>
    %8 = arith.truncf %7 : vector<16x64xf32> to vector<16x64xbf16>
    %c0_6 = arith.constant 0 : index
    %c0_7 = arith.constant 0 : index
    %c0_8 = arith.constant 0 : index
    %9 = vector.load %arg5[%c0_6, %c0_7, %c0_8] : memref<1x16x64xbf16, #tpu.memory_space<vmem>>, vector<1x16x64xbf16>
    %10 = vector.shape_cast %9 : vector<1x16x64xbf16> to vector<16x64xbf16>
    %11 = vector.shape_cast %8 : vector<16x64xbf16> to vector<1x16x64xbf16>
    tpu.vector_store %arg5[%c0_6, %c0_7, %c0_8], %11 {strides = array<i32>} : memref<1x16x64xbf16, #tpu.memory_space<vmem>>, vector<1x16x64xbf16>,
    return
  }
  func.func @transform_0(%arg0: i32, %arg1: i32) -> (i32, i32, i32) {
    %c0_i32 = arith.constant 0 : i32
    %c0_i32_0 = arith.constant 0 : i32
    return %arg0, %c0_i32, %arg1 : i32, i32, i32
  }
  func.func @transform_1(%arg0: i32, %arg1: i32) -> (i32, i32) {
    %c0_i32 = arith.constant 0 : i32
    %c0_i32_0 = arith.constant 0 : i32
    %c0_i32_1 = arith.constant 0 : i32
    return %c0_i32, %c0_i32_0 : i32, i32
  }
  func.func @transform_2(%arg0: i32, %arg1: i32) -> (i32, i32) {
    %c0_i32 = arith.constant 0 : i32
    %c0_i32_0 = arith.constant 0 : i32
    %c0_i32_1 = arith.constant 0 : i32
    return %c0_i32, %c0_i32_0 : i32, i32
  }
  func.func @transform_3(%arg0: i32, %arg1: i32) -> (i32, i32, i32) {
    %c0_i32 = arith.constant 0 : i32
    %c0_i32_0 = arith.constant 0 : i32
    return %arg0, %c0_i32, %arg1 : i32, i32, i32
  }
}

module attributes {stable_mosaic.version = 11 : i64} {
  func.func @conv_nostore_kernel(%arg0: i32, %arg1: i32, %arg2: memref<1x400x16xbf16, #tpu.memory_space<vmem>>, %arg3: memref<32x400xbf16, #tpu.memory_space<vmem>>, %arg4: memref<32x1xf32, #tpu.memory_space<vmem>>, %arg5: memref<1x1x32x2xf32, #tpu.memory_space<vmem>>) attributes {dimension_semantics = [#tpu.dimension_semantics<parallel>, #tpu.dimension_semantics<arbitrary>], iteration_bounds = array<i64: 2, 1>, scalar_prefetch = 0 : i64, scratch_operands = 0 : i64, tpu.core_type = #tpu.core_type<tc>, window_params = [{transform_indices = @transform_0, window_bounds = array<i64: 1, 400, 16>}, {pipeline_mode = #tpu.pipeline_mode<synchronous>, transform_indices = @transform_1, window_bounds = array<i64: 32, 400>}, {pipeline_mode = #tpu.pipeline_mode<synchronous>, transform_indices = @transform_2, window_bounds = array<i64: 32, 1>}, {transform_indices = @transform_3, window_bounds = array<i64: 1, 1, 32, 2>}]} {
    %c0 = arith.constant 0 : index
    %c0_0 = arith.constant 0 : index
    %0 = vector.load %arg3[%c0, %c0_0] : memref<32x400xbf16, #tpu.memory_space<vmem>>, vector<32x400xbf16>
    %c0_1 = arith.constant 0 : index
    %c0_2 = arith.constant 0 : index
    %c0_3 = arith.constant 0 : index
    %1 = vector.load %arg2[%c0_1, %c0_2, %c0_3] : memref<1x400x16xbf16, #tpu.memory_space<vmem>>, vector<1x400x16xbf16>
    %2 = vector.shape_cast %1 : vector<1x400x16xbf16> to vector<400x16xbf16>
    %cst = arith.constant dense<0.000000e+00> : vector<32x16xf32>
    %3 = tpu.matmul %0, %2, %cst {dimension_numbers = #tpu.dot_dimension_numbers<[1], [0], [0], [1], [0, 0, 1, 1], [], []>} : vector<32x400xbf16>, vector<400x16xbf16>, vector<32x16xf32> -> vector<32x16xf32>
    %c0_4 = arith.constant 0 : index
    %c0_5 = arith.constant 0 : index
    %4 = vector.load %arg4[%c0_4, %c0_5] : memref<32x1xf32, #tpu.memory_space<vmem>>, vector<32x1xf32>
    %5 = vector.broadcast %4 : vector<32x1xf32> to vector<32x16xf32>
    %6 = arith.addf %3, %5 : vector<32x16xf32>
    %cst_6 = arith.constant 0.000000e+00 : f32
    %7 = vector.broadcast %cst_6 : f32 to vector<32x16xf32>
    %8 = arith.maximumf %6, %7 : vector<32x16xf32>
    %9 = tpu.iota {dimensions = array<i32: 1>} : vector<32x16xi32>
    %c16_i32 = arith.constant 16 : i32
    %10 = arith.muli %arg1, %c16_i32 : i32
    %c16_i32_7 = arith.constant 16 : i32
    %11 = arith.subi %c16_i32_7, %10 : i32
    %12 = vector.broadcast %11 : i32 to vector<32x16xi32>
    %13 = arith.cmpi slt, %9, %12 : vector<32x16xi32>
    %cst_8 = arith.constant 0.000000e+00 : f32
    %14 = vector.broadcast %cst_8 : f32 to vector<32x16xf32>
    %15 = arith.select %13, %8, %14 : vector<32x16xi1>, vector<32x16xf32>
    %cst_9 = arith.constant dense<0.000000e+00> : vector<32xf32>
    %16 = vector.multi_reduction <add>, %15, %cst_9 [1] : vector<32x16xf32> to vector<32xf32>
    %17 = vector.shape_cast %16 : vector<32xf32> to vector<32x1xf32>
    %18 = arith.mulf %15, %15 : vector<32x16xf32>
    %cst_10 = arith.constant dense<0.000000e+00> : vector<32xf32>
    %19 = vector.multi_reduction <add>, %18, %cst_10 [1] : vector<32x16xf32> to vector<32xf32>
    %20 = vector.shape_cast %19 : vector<32xf32> to vector<32x1xf32>
    %21 = tpu.concatenate %17, %20 in 1 : vector<32x1xf32>, vector<32x1xf32> -> vector<32x2xf32>
    %22 = vector.shape_cast %21 : vector<32x2xf32> to vector<1x1x32x2xf32>
    %c0_11 = arith.constant 0 : index
    %c0_12 = arith.constant 0 : index
    %c0_13 = arith.constant 0 : index
    %c0_14 = arith.constant 0 : index
    %23 = vector.load %arg5[%c0_11, %c0_12, %c0_13, %c0_14] : memref<1x1x32x2xf32, #tpu.memory_space<vmem>>, vector<1x1x32x2xf32>
    tpu.vector_store %arg5[%c0_11, %c0_12, %c0_13, %c0_14], %22 {strides = array<i32>} : memref<1x1x32x2xf32, #tpu.memory_space<vmem>>, vector<1x1x32x2xf32>,
    return
  }
  func.func @transform_0(%arg0: i32, %arg1: i32) -> (i32, i32, i32) {
    %c0_i32 = arith.constant 0 : i32
    %c0_i32_0 = arith.constant 0 : i32
    return %arg0, %c0_i32, %arg1 : i32, i32, i32
  }
  func.func @transform_1(%arg0: i32, %arg1: i32) -> (i32, i32) {
    %c0_i32 = arith.constant 0 : i32
    %c0_i32_0 = arith.constant 0 : i32
    %c0_i32_1 = arith.constant 0 : i32
    return %c0_i32, %c0_i32_0 : i32, i32
  }
  func.func @transform_2(%arg0: i32, %arg1: i32) -> (i32, i32) {
    %c0_i32 = arith.constant 0 : i32
    %c0_i32_0 = arith.constant 0 : i32
    %c0_i32_1 = arith.constant 0 : i32
    return %c0_i32, %c0_i32_0 : i32, i32
  }
  func.func @transform_3(%arg0: i32, %arg1: i32) -> (i32, i32, i32, i32) {
    %c0_i32 = arith.constant 0 : i32
    %c0_i32_0 = arith.constant 0 : i32
    %c0_i32_1 = arith.constant 0 : i32
    return %arg0, %arg1, %c0_i32, %c0_i32_0 : i32, i32, i32, i32
  }
}

module attributes {stable_mosaic.version = 11 : i64} {
  func.func @head_kernel(%arg0: memref<2x32xf32, #tpu.memory_space<vmem>>, %arg1: memref<1x32xf32, #tpu.memory_space<vmem>>, %arg2: memref<1x32xf32, #tpu.memory_space<vmem>>, %arg3: memref<32x2xf32, #tpu.memory_space<vmem>>, %arg4: memref<1x2xf32, #tpu.memory_space<vmem>>, %arg5: memref<2x2xf32, #tpu.memory_space<vmem>>) attributes {dimension_semantics = [], scalar_prefetch = 0 : i64, scratch_operands = 0 : i64, tpu.core_type = #tpu.core_type<tc>} {
    %c0 = arith.constant 0 : index
    %c0_0 = arith.constant 0 : index
    %0 = vector.load %arg0[%c0, %c0_0] : memref<2x32xf32, #tpu.memory_space<vmem>>, vector<2x32xf32>
    %c0_1 = arith.constant 0 : index
    %c0_2 = arith.constant 0 : index
    %1 = vector.load %arg1[%c0_1, %c0_2] : memref<1x32xf32, #tpu.memory_space<vmem>>, vector<1x32xf32>
    %2 = vector.broadcast %1 : vector<1x32xf32> to vector<2x32xf32>
    %3 = arith.mulf %0, %2 : vector<2x32xf32>
    %c0_3 = arith.constant 0 : index
    %c0_4 = arith.constant 0 : index
    %4 = vector.load %arg2[%c0_3, %c0_4] : memref<1x32xf32, #tpu.memory_space<vmem>>, vector<1x32xf32>
    %5 = vector.broadcast %4 : vector<1x32xf32> to vector<2x32xf32>
    %6 = arith.addf %3, %5 : vector<2x32xf32>
    %c0_5 = arith.constant 0 : index
    %c0_6 = arith.constant 0 : index
    %7 = vector.load %arg3[%c0_5, %c0_6] : memref<32x2xf32, #tpu.memory_space<vmem>>, vector<32x2xf32>
    %cst = arith.constant dense<0.000000e+00> : vector<2x2xf32>
    %8 = tpu.matmul %6, %7, %cst {dimension_numbers = #tpu.dot_dimension_numbers<[1], [0], [0], [1], [0, 0, 1, 1], [], []>} : vector<2x32xf32>, vector<32x2xf32>, vector<2x2xf32> -> vector<2x2xf32>
    %c0_7 = arith.constant 0 : index
    %c0_8 = arith.constant 0 : index
    %9 = vector.load %arg4[%c0_7, %c0_8] : memref<1x2xf32, #tpu.memory_space<vmem>>, vector<1x2xf32>
    %10 = vector.broadcast %9 : vector<1x2xf32> to vector<2x2xf32>
    %11 = arith.addf %8, %10 : vector<2x2xf32>
    %c0_9 = arith.constant 0 : index
    %c0_10 = arith.constant 0 : index
    %12 = vector.load %arg5[%c0_9, %c0_10] : memref<2x2xf32, #tpu.memory_space<vmem>>, vector<2x2xf32>
    tpu.vector_store %arg5[%c0_9, %c0_10], %11 {strides = array<i32>} : memref<2x2xf32, #tpu.memory_space<vmem>>, vector<2x2xf32>,
    return
  }
}

</mosaic_0001>

<llo_original>
// kernel: contrastive_forward.5
$region0: #{contrastive_forward.5}
  #allocation0 [shape = 'u32[]', space=smem, size = 0x4, offset = 0x4, fixed_abs, tag = 'smem constant byte address 0x4 - core index']
  #allocation1 [shape = 'u32[144,128]{1,0:T(1,128)}', space=vmem, size = 0x12000, scoped, tag = 'internal scratch']
  %s0 = inlined_call_operand.vmem [shape: f32[2,16,64], index: 0, kind: input, shape index: {}]
  %s1 = inlined_call_operand.vmem [shape: f32[16,1], index: 1, kind: input, shape index: {}]
  %s2 = inlined_call_operand.vmem [shape: f32[16,1], index: 2, kind: input, shape index: {}]
  %s3 = inlined_call_operand.vmem [shape: bf16[2,16,64], index: 3, kind: output, shape index: {}]
  %s4 = sld [smem:[#allocation0]]
  $region45: #{contrastive_forward.5} parent=0
    _
  %s6 = ssub.s32 1, %s4
  %s7 = scalar_select 0, %s6, %s4
  loop: start=0, step=1, limit=4
  $region2: #{contrastive_forward.5} parent=0 // loop_pre_header
    _
  $region3: #{contrastive_forward.5} parent=0 // loop_header
    %s9 = sphi 0, %s13
    %p10 = scmp.ge.s32.totalorder %s9, 4
    %s16 = sphi 0, %s28
    %s17 = sphi 0, %s24
    %s18 = sphi 0, %s16
    %s19 = sphi 0, %s17
    %s20 = sphi 0, %s18
    %s21 = sphi 0, %s19
    %s33 = sphi 0, %s35
    %s36 = sphi 0, %s33
    %s37 = sphi 0, %s36
    %s53 = sphi 0, %s37
    %s57 = sphi 0, %s57
    %s59 = sphi 0, %s57
    %s60 = sphi 0, %s59
    %s74 = sphi 0, %s60
    %s78 = sphi 0, %s78
    %s80 = sphi 0, %s78
    %s81 = sphi 0, %s80
    %s95 = sphi 0, %s81
    %s103 = sphi 0, %s105
    %s106 = sphi 0, %s103
    %s107 = sphi 0, %s106
    %s123 = sphi 0, %s107
  $region4: #{contrastive_forward.5} parent=0 // loop_header_branch
    %12 = sbr.rel (%p10) target = $region8
  $region5: #{contrastive_forward.5} parent=0 // loop_body
    %s14 = ssub.s32 %s9, 1
    %s15 = ssub.s32 %s9, 2
    %s22 = sadd.s32 1, %s17
    %p23 = scmp.ge.s32.totalorder %s22, 1
    %s24 = scalar_select %p23, 0, %s22
    %s25 = sadd.s32 1, %s16
    %s26 = scalar_select %p23, %s25, %s16
    %p27 = scmp.ge.s32.totalorder %s26, 2
    %s28 = scalar_select %p27, 0, %s26
    %s29 = ssub.s32 %s16, %s28
    %s30 = ssub.s32 %s17, %s24
    %s31 = sor.u32 %s29, %s30
    %p32 = scmp.eq.s32.totalorder %s31, 0
    %s34 = sadd.s32 %s33, 1
    %s35 = scalar_select %p32, %s33, %s34
    %p38 = pneg %p32
    %p39 = scmp.eq.s32.totalorder %s9, 1
    %p40 = por %p38, %p39
    %p41 = scmp.ne.s32.totalorder %s33, %s36
    %p42 = scmp.eq.s32.totalorder %s9, 0
    %p43 = por %p41, %p42
    %p44 = scmp.ne.s32.totalorder %s33, %s36
    %p45 = scmp.eq.s32.totalorder %s14, 1
    %p46 = por %p44, %p45
    %p47 = scmp.ne.s32.totalorder %s36, %s37
    %p48 = scmp.eq.s32.totalorder %s14, 0
    %p49 = por %p47, %p48
    %p50 = scmp.ne.s32.totalorder %s36, %s37
    %p51 = scmp.eq.s32.totalorder %s15, 1
    %p52 = por %p50, %p51
    %p54 = scmp.ne.s32.totalorder %s37, %s53
    %p55 = scmp.eq.s32.totalorder %s15, 0
    %p56 = por %p54, %p55
    %s58 = sadd.s32 %s57, 1
    %p61 = scmp.eq.s32.totalorder %s9, 1
    %p62 = scmp.ne.s32.totalorder %s57, %s59
    %p63 = scmp.eq.s32.totalorder %s9, 0
    %p64 = por %p62, %p63
    %p65 = scmp.ne.s32.totalorder %s57, %s59
    %p66 = scmp.eq.s32.totalorder %s14, 1
    %p67 = por %p65, %p66
    %p68 = scmp.ne.s32.totalorder %s59, %s60
    %p69 = scmp.eq.s32.totalorder %s14, 0
    %p70 = por %p68, %p69
    %p71 = scmp.ne.s32.totalorder %s59, %s60
    %p72 = scmp.eq.s32.totalorder %s15, 1
    %p73 = por %p71, %p72
    %p75 = scmp.ne.s32.totalorder %s60, %s74
    %p76 = scmp.eq.s32.totalorder %s15, 0
    %p77 = por %p75, %p76
    %s79 = sadd.s32 %s78, 1
    %p82 = scmp.eq.s32.totalorder %s9, 1
    %p83 = scmp.ne.s32.totalorder %s78, %s80
    %p84 = scmp.eq.s32.totalorder %s9, 0
    %p85 = por %p83, %p84
    %p86 = scmp.ne.s32.totalorder %s78, %s80
    %p87 = scmp.eq.s32.totalorder %s14, 1
    %p88 = por %p86, %p87
    %p89 = scmp.ne.s32.totalorder %s80, %s81
    %p90 = scmp.eq.s32.totalorder %s14, 0
    %p91 = por %p89, %p90
    %p92 = scmp.ne.s32.totalorder %s80, %s81
    %p93 = scmp.eq.s32.totalorder %s15, 1
    %p94 = por %p92, %p93
    %p96 = scmp.ne.s32.totalorder %s81, %s95
    %p97 = scmp.eq.s32.totalorder %s15, 0
    %p98 = por %p96, %p97
    %s99 = ssub.s32 %s16, %s28
    %s100 = ssub.s32 %s17, %s24
    %s101 = sor.u32 %s99, %s100
    %p102 = scmp.eq.s32.totalorder %s101, 0
    %s104 = sadd.s32 %s103, 1
    %s105 = scalar_select %p102, %s103, %s104
    %p108 = pneg %p102
    %p109 = scmp.eq.s32.totalorder %s9, 1
    %p110 = por %p108, %p109
    %p111 = scmp.ne.s32.totalorder %s103, %s106
    %p112 = scmp.eq.s32.totalorder %s9, 0
    %p113 = por %p111, %p112
    %p114 = scmp.ne.s32.totalorder %s103, %s106
    %p115 = scmp.eq.s32.totalorder %s14, 1
    %p116 = por %p114, %p115
    %p117 = scmp.ne.s32.totalorder %s106, %s107
    %p118 = scmp.eq.s32.totalorder %s14, 0
    %p119 = por %p117, %p118
    %p120 = scmp.ne.s32.totalorder %s106, %s107
    %p121 = scmp.eq.s32.totalorder %s15, 1
    %p122 = por %p120, %p121
    %p124 = scmp.ne.s32.totalorder %s107, %s123
    %p125 = scmp.eq.s32.totalorder %s15, 0
    %p126 = por %p124, %p125
    %p127 = scmp.le.s32.totalorder 1, %s9
    %p128 = scmp.lt.s32.totalorder %s9, 3
    %p129 = pnand %p127, %p128
    %p130 = pneg %p129
    // Predicated region
    $region9: #{contrastive_forward.5} parent=5 // pred_check
      _
    $region10: #{contrastive_forward.5} parent=5 // pred_check_branch
      %132 = sbr.rel (%p129) target = $region12
    $region11: #{contrastive_forward.5} parent=5 // pred_region
      %s133 = ssub.s32 %s9, 1
      // Predicated region
      $region13: #{contrastive_forward.5} parent=11 // pred_check
        %p134 = pneg %p70
      $region14: #{contrastive_forward.5} parent=11 // pred_check_branch
        %136 = sbr.rel (%p134) target = $region16
      $region15: #{contrastive_forward.5} parent=11 // pred_region
        _
      $region16: #{contrastive_forward.5} parent=11 // pred_fallthru
        _
      // Predicated region
      $region17: #{contrastive_forward.5} parent=11 // pred_check
        %p137 = pneg %p91
      $region18: #{contrastive_forward.5} parent=11 // pred_check_branch
        %139 = sbr.rel (%p137) target = $region20
      $region19: #{contrastive_forward.5} parent=11 // pred_region
        _
      $region20: #{contrastive_forward.5} parent=11 // pred_fallthru
        _
    $region12: #{contrastive_forward.5} parent=5 // pred_fallthru
      _
    %p140 = scmp.lt.s32.totalorder %s9, 2
    // Predicated region
    $region21: #{contrastive_forward.5} parent=5 // pred_check
      %p141 = pneg %p140
    $region22: #{contrastive_forward.5} parent=5 // pred_check_branch
      %143 = sbr.rel (%p141) target = $region24
    $region23: #{contrastive_forward.5} parent=5 // pred_region
      // Predicated region
      $region25: #{contrastive_forward.5} parent=23 // pred_check
        %p144 = pneg %p43
      $region26: #{contrastive_forward.5} parent=23 // pred_check_branch
        %146 = sbr.rel (%p144) target = $region28
      $region27: #{contrastive_forward.5} parent=23 // pred_region
        %p147 = scmp.lt.s32.totalorder %s16, 1
        %s148 = scalar_select %p147, %s16, 1
        %p149 = scmp.lt.s32.totalorder %s17, 0
        %s150 = scalar_select %p149, %s17, 0
        %s151 = smul.addr %s148, 2
        %s152 = sadd.s32 %s150, %s151
        %s153 = smul.addr %s152, 8
        %s154 = scalar_lea.vmem %s0, %s153
      $region28: #{contrastive_forward.5} parent=23 // pred_fallthru
        _
    $region24: #{contrastive_forward.5} parent=5 // pred_fallthru
      _
    %p155 = scmp.le.s32.totalorder 1, %s9
    %p156 = scmp.lt.s32.totalorder %s9, 3
    %p157 = pnand %p155, %p156
    %p158 = pneg %p157
    // Predicated region
    $region29: #{contrastive_forward.5} parent=5 // pred_check
      _
    $region30: #{contrastive_forward.5} parent=5 // pred_check_branch
      %160 = sbr.rel (%p157) target = $region32
    $region31: #{contrastive_forward.5} parent=5 // pred_region
      %s161 = ssub.s32 %s9, 1
      %p162 = scmp.lt.s32.totalorder %s18, 1
      %s163 = scalar_select %p162, %s18, 1
      %p164 = scmp.lt.s32.totalorder %s19, 0
      %s165 = scalar_select %p164, %s19, 0
      %s166 = smul.addr %s163, 2
      %s167 = sadd.s32 %s165, %s166
      %s168 = smul.addr %s167, 8
      %s169 = scalar_lea.vmem %s0, %s168
      %p170 = pneg %p49
      %p171 = pneg %p46
      %p172 = pneg %p70
      %p173 = pneg %p67
      %p174 = pneg %p91
      %p175 = pneg %p88
      %p176 = pneg %p119
      %p177 = pneg %p116
      %p178 = scmp.lt.s32.totalorder %s18, 1
      %s179 = scalar_select %p178, %s18, 1
      %p180 = scmp.lt.s32.totalorder %s19, 0
      %s181 = scalar_select %p180, %s19, 0
      %s182 = smul.addr %s179, 2
      %s183 = sadd.s32 %s181, %s182
      %s184 = smul.addr %s183, 4
      %s185 = scalar_lea.vmem %s3, %s184
      %p186 = scmp.lt.s32.totalorder %s18, 1
      %s187 = scalar_select %p186, %s18, 1
      %p188 = scmp.lt.s32.totalorder %s19, 0
      %s189 = scalar_select %p188, %s19, 0
      %s190 = smul.addr %s187, 2
      %s191 = sadd.s32 %s189, %s190
      %s192 = smul.addr %s191, 8
      %s193 = scalar_lea.vmem %s0, %s192
      %p194 = scmp.lt.s32.totalorder %s18, 1
      %s195 = scalar_select %p194, %s18, 1
      %p196 = scmp.lt.s32.totalorder %s19, 0
      %s197 = scalar_select %p196, %s19, 0
      %s198 = smul.addr %s195, 2
      %s199 = sadd.s32 %s197, %s198
      %s200 = smul.addr %s199, 4
      %s201 = scalar_lea.vmem %s3, %s200
      %v202 = vld [vmem:[%s193] sm:$0xff]
      %v203 = vld [vmem:[%s193 + $0x8] sm:$0xff]
      %v204 = vld [vmem:[%s1] sm:$0xff]
      %v205 = vld [vmem:[%s1 + $0x8] sm:$0xff]
      %207 = vset.pattern.permute.xlu0 0
      %208 = vperm.xlu0 %207, %v204
      %v209 = vpop.permute.xlu0 %208
      %212 = vset.pattern.permute.xlu0 0
      %213 = vperm.xlu0 %212, %v205
      %v214 = vpop.permute.xlu0 %213
      %v216 = vmul.f32 %v202, %v209
      %v217 = vmul.f32 %v203, %v214
      %v218 = vld [vmem:[%s2] sm:$0xff]
      %v219 = vld [vmem:[%s2 + $0x8] sm:$0xff]
      %221 = vset.pattern.permute.xlu0 0
      %222 = vperm.xlu0 %221, %v218
      %v223 = vpop.permute.xlu0 %222
      %226 = vset.pattern.permute.xlu0 0
      %227 = vperm.xlu0 %226, %v219
      %v228 = vpop.permute.xlu0 %227
      %v230 = vadd.f32 %v216, %v223
      %v231 = vadd.f32 %v217, %v228
      %v232 = vpack.c.bf16 %v231, %v230
      %v234 = vunpack.c.l.b16 %v232
      %v235 = vunpack.c.h.b16 %v232
      %v236 = vpack.c.b16 %v234, %v234
      %v237 = vpack.c.b16 %v235, %v235
      %vm240 = vcmask 519168
      %241 = vst.msk [vmem:[%s201] sm:$0xf] %vm240, %v236
      %242 = vst.msk [vmem:[%s201 + $0x4] sm:$0xf] %vm240, %v237
      %p243 = scmp.lt.s32.totalorder %s18, 1
      %s244 = scalar_select %p243, %s18, 1
      %p245 = scmp.lt.s32.totalorder %s19, 0
      %s246 = scalar_select %p245, %s19, 0
      %s247 = smul.addr %s244, 2
      %s248 = sadd.s32 %s246, %s247
      %s249 = smul.addr %s248, 4
      %s250 = scalar_lea.vmem %s3, %s249
      // Predicated region
      $region33: #{contrastive_forward.5} parent=31 // pred_check
        %p251 = pneg %p116
      $region34: #{contrastive_forward.5} parent=31 // pred_check_branch
        %253 = sbr.rel (%p251) target = $region36
      $region35: #{contrastive_forward.5} parent=31 // pred_region
        _
      $region36: #{contrastive_forward.5} parent=31 // pred_fallthru
        _
    $region32: #{contrastive_forward.5} parent=5 // pred_fallthru
      _
    %p254 = scmp.le.s32.totalorder 2, %s9
    // Predicated region
    $region37: #{contrastive_forward.5} parent=5 // pred_check
      %p255 = pneg %p254
    $region38: #{contrastive_forward.5} parent=5 // pred_check_branch
      %257 = sbr.rel (%p255) target = $region40
    $region39: #{contrastive_forward.5} parent=5 // pred_region
      %s258 = ssub.s32 %s9, 2
      // Predicated region
      $region41: #{contrastive_forward.5} parent=39 // pred_check
        %p259 = pneg %p122
      $region42: #{contrastive_forward.5} parent=39 // pred_check_branch
        %261 = sbr.rel (%p259) target = $region44
      $region43: #{contrastive_forward.5} parent=39 // pred_region
        %p262 = scmp.lt.s32.totalorder %s20, 1
        %s263 = scalar_select %p262, %s20, 1
        %p264 = scmp.lt.s32.totalorder %s21, 0
        %s265 = scalar_select %p264, %s21, 0
        %s266 = smul.addr %s263, 2
        %s267 = sadd.s32 %s265, %s266
        %s268 = smul.addr %s267, 4
        %s269 = scalar_lea.vmem %s3, %s268
      $region44: #{contrastive_forward.5} parent=39 // pred_fallthru
        _
    $region40: #{contrastive_forward.5} parent=5 // pred_fallthru
      _
  $region6: #{contrastive_forward.5} parent=0 // loop_footer
    %s13 = sadd.s32 1, %s9
  $region7: #{contrastive_forward.5} parent=0 // loop_footer_branch
    %8 = sbr.rel target = $region3
  $region8: #{contrastive_forward.5} parent=0 // loop_exit
    _

// kernel: contrastive_forward.4
$region0: #{contrastive_forward.4}
  #allocation0 [shape = 'u32[]', space=smem, size = 0x4, offset = 0x4, fixed_abs, tag = 'smem constant byte address 0x4 - core index']
  #allocation1 [shape = 'u32[144,128]{1,0:T(1,128)}', space=vmem, size = 0x12000, scoped, tag = 'internal scratch']
  %s0 = inlined_call_operand.vmem [shape: bf16[2,49,64], index: 0, kind: input, shape index: {}]
  %s1 = inlined_call_operand.vmem [shape: bf16[16,49], index: 1, kind: input, shape index: {}]
  %s2 = inlined_call_operand.vmem [shape: f32[16,1], index: 2, kind: input, shape index: {}]
  %s3 = inlined_call_operand.vmem [shape: f32[2,16,64], index: 3, kind: output, shape index: {0}]
  %s4 = inlined_call_operand.vmem [shape: f32[2,1,16,2], index: 4, kind: output, shape index: {1}]
  %5 = xla_tuple %s3, %s4
  %s6 = sld [smem:[#allocation0]]
  $region53: #{contrastive_forward.4} parent=0
    _
  %s8 = ssub.s32 1, %s6
  %s9 = scalar_select 0, %s8, %s6
  loop: start=0, step=1, limit=4
  $region2: #{contrastive_forward.4} parent=0 // loop_pre_header
    _
  $region3: #{contrastive_forward.4} parent=0 // loop_header
    %s11 = sphi 0, %s15
    %p12 = scmp.ge.s32.totalorder %s11, 4
    %s18 = sphi 0, %s30
    %s19 = sphi 0, %s26
    %s20 = sphi 0, %s18
    %s21 = sphi 0, %s19
    %s22 = sphi 0, %s20
    %s23 = sphi 0, %s21
    %s35 = sphi 0, %s37
    %s38 = sphi 0, %s35
    %s39 = sphi 0, %s38
    %s55 = sphi 0, %s39
    %s59 = sphi 0, %s59
    %s61 = sphi 0, %s59
    %s62 = sphi 0, %s61
    %s76 = sphi 0, %s62
    %s80 = sphi 0, %s80
    %s82 = sphi 0, %s80
    %s83 = sphi 0, %s82
    %s97 = sphi 0, %s83
    %s105 = sphi 0, %s107
    %s108 = sphi 0, %s105
    %s109 = sphi 0, %s108
    %s125 = sphi 0, %s109
    %s133 = sphi 0, %s135
    %s136 = sphi 0, %s133
    %s137 = sphi 0, %s136
    %s153 = sphi 0, %s137
  $region4: #{contrastive_forward.4} parent=0 // loop_header_branch
    %14 = sbr.rel (%p12) target = $region8
  $region5: #{contrastive_forward.4} parent=0 // loop_body
    %s16 = ssub.s32 %s11, 1
    %s17 = ssub.s32 %s11, 2
    %s24 = sadd.s32 1, %s19
    %p25 = scmp.ge.s32.totalorder %s24, 1
    %s26 = scalar_select %p25, 0, %s24
    %s27 = sadd.s32 1, %s18
    %s28 = scalar_select %p25, %s27, %s18
    %p29 = scmp.ge.s32.totalorder %s28, 2
    %s30 = scalar_select %p29, 0, %s28
    %s31 = ssub.s32 %s18, %s30
    %s32 = ssub.s32 %s19, %s26
    %s33 = sor.u32 %s31, %s32
    %p34 = scmp.eq.s32.totalorder %s33, 0
    %s36 = sadd.s32 %s35, 1
    %s37 = scalar_select %p34, %s35, %s36
    %p40 = pneg %p34
    %p41 = scmp.eq.s32.totalorder %s11, 1
    %p42 = por %p40, %p41
    %p43 = scmp.ne.s32.totalorder %s35, %s38
    %p44 = scmp.eq.s32.totalorder %s11, 0
    %p45 = por %p43, %p44
    %p46 = scmp.ne.s32.totalorder %s35, %s38
    %p47 = scmp.eq.s32.totalorder %s16, 1
    %p48 = por %p46, %p47
    %p49 = scmp.ne.s32.totalorder %s38, %s39
    %p50 = scmp.eq.s32.totalorder %s16, 0
    %p51 = por %p49, %p50
    %p52 = scmp.ne.s32.totalorder %s38, %s39
    %p53 = scmp.eq.s32.totalorder %s17, 1
    %p54 = por %p52, %p53
    %p56 = scmp.ne.s32.totalorder %s39, %s55
    %p57 = scmp.eq.s32.totalorder %s17, 0
    %p58 = por %p56, %p57
    %s60 = sadd.s32 %s59, 1
    %p63 = scmp.eq.s32.totalorder %s11, 1
    %p64 = scmp.ne.s32.totalorder %s59, %s61
    %p65 = scmp.eq.s32.totalorder %s11, 0
    %p66 = por %p64, %p65
    %p67 = scmp.ne.s32.totalorder %s59, %s61
    %p68 = scmp.eq.s32.totalorder %s16, 1
    %p69 = por %p67, %p68
    %p70 = scmp.ne.s32.totalorder %s61, %s62
    %p71 = scmp.eq.s32.totalorder %s16, 0
    %p72 = por %p70, %p71
    %p73 = scmp.ne.s32.totalorder %s61, %s62
    %p74 = scmp.eq.s32.totalorder %s17, 1
    %p75 = por %p73, %p74
    %p77 = scmp.ne.s32.totalorder %s62, %s76
    %p78 = scmp.eq.s32.totalorder %s17, 0
    %p79 = por %p77, %p78
    %s81 = sadd.s32 %s80, 1
    %p84 = scmp.eq.s32.totalorder %s11, 1
    %p85 = scmp.ne.s32.totalorder %s80, %s82
    %p86 = scmp.eq.s32.totalorder %s11, 0
    %p87 = por %p85, %p86
    %p88 = scmp.ne.s32.totalorder %s80, %s82
    %p89 = scmp.eq.s32.totalorder %s16, 1
    %p90 = por %p88, %p89
    %p91 = scmp.ne.s32.totalorder %s82, %s83
    %p92 = scmp.eq.s32.totalorder %s16, 0
    %p93 = por %p91, %p92
    %p94 = scmp.ne.s32.totalorder %s82, %s83
    %p95 = scmp.eq.s32.totalorder %s17, 1
    %p96 = por %p94, %p95
    %p98 = scmp.ne.s32.totalorder %s83, %s97
    %p99 = scmp.eq.s32.totalorder %s17, 0
    %p100 = por %p98, %p99
    %s101 = ssub.s32 %s18, %s30
    %s102 = ssub.s32 %s19, %s26
    %s103 = sor.u32 %s101, %s102
    %p104 = scmp.eq.s32.totalorder %s103, 0
    %s106 = sadd.s32 %s105, 1
    %s107 = scalar_select %p104, %s105, %s106
    %p110 = pneg %p104
    %p111 = scmp.eq.s32.totalorder %s11, 1
    %p112 = por %p110, %p111
    %p113 = scmp.ne.s32.totalorder %s105, %s108
    %p114 = scmp.eq.s32.totalorder %s11, 0
    %p115 = por %p113, %p114
    %p116 = scmp.ne.s32.totalorder %s105, %s108
    %p117 = scmp.eq.s32.totalorder %s16, 1
    %p118 = por %p116, %p117
    %p119 = scmp.ne.s32.totalorder %s108, %s109
    %p120 = scmp.eq.s32.totalorder %s16, 0
    %p121 = por %p119, %p120
    %p122 = scmp.ne.s32.totalorder %s108, %s109
    %p123 = scmp.eq.s32.totalorder %s17, 1
    %p124 = por %p122, %p123
    %p126 = scmp.ne.s32.totalorder %s109, %s125
    %p127 = scmp.eq.s32.totalorder %s17, 0
    %p128 = por %p126, %p127
    %s129 = ssub.s32 %s18, %s30
    %s130 = ssub.s32 %s19, %s26
    %s131 = sor.u32 %s129, %s130
    %p132 = scmp.eq.s32.totalorder %s131, 0
    %s134 = sadd.s32 %s133, 1
    %s135 = scalar_select %p132, %s133, %s134
    %p138 = pneg %p132
    %p139 = scmp.eq.s32.totalorder %s11, 1
    %p140 = por %p138, %p139
    %p141 = scmp.ne.s32.totalorder %s133, %s136
    %p142 = scmp.eq.s32.totalorder %s11, 0
    %p143 = por %p141, %p142
    %p144 = scmp.ne.s32.totalorder %s133, %s136
    %p145 = scmp.eq.s32.totalorder %s16, 1
    %p146 = por %p144, %p145
    %p147 = scmp.ne.s32.totalorder %s136, %s137
    %p148 = scmp.eq.s32.totalorder %s16, 0
    %p149 = por %p147, %p148
    %p150 = scmp.ne.s32.totalorder %s136, %s137
    %p151 = scmp.eq.s32.totalorder %s17, 1
    %p152 = por %p150, %p151
    %p154 = scmp.ne.s32.totalorder %s137, %s153
    %p155 = scmp.eq.s32.totalorder %s17, 0
    %p156 = por %p154, %p155
    %p157 = scmp.le.s32.totalorder 1, %s11
    %p158 = scmp.lt.s32.totalorder %s11, 3
    %p159 = pnand %p157, %p158
    %p160 = pneg %p159
    // Predicated region
    $region9: #{contrastive_forward.4} parent=5 // pred_check
      _
    $region10: #{contrastive_forward.4} parent=5 // pred_check_branch
      %162 = sbr.rel (%p159) target = $region12
    $region11: #{contrastive_forward.4} parent=5 // pred_region
      %s163 = ssub.s32 %s11, 1
      // Predicated region
      $region13: #{contrastive_forward.4} parent=11 // pred_check
        %p164 = pneg %p72
      $region14: #{contrastive_forward.4} parent=11 // pred_check_branch
        %166 = sbr.rel (%p164) target = $region16
      $region15: #{contrastive_forward.4} parent=11 // pred_region
        _
      $region16: #{contrastive_forward.4} parent=11 // pred_fallthru
        _
      // Predicated region
      $region17: #{contrastive_forward.4} parent=11 // pred_check
        %p167 = pneg %p93
      $region18: #{contrastive_forward.4} parent=11 // pred_check_branch
        %169 = sbr.rel (%p167) target = $region20
      $region19: #{contrastive_forward.4} parent=11 // pred_region
        _
      $region20: #{contrastive_forward.4} parent=11 // pred_fallthru
        _
    $region12: #{contrastive_forward.4} parent=5 // pred_fallthru
      _
    %p170 = scmp.lt.s32.totalorder %s11, 2
    // Predicated region
    $region21: #{contrastive_forward.4} parent=5 // pred_check
      %p171 = pneg %p170
    $region22: #{contrastive_forward.4} parent=5 // pred_check_branch
      %173 = sbr.rel (%p171) target = $region24
    $region23: #{contrastive_forward.4} parent=5 // pred_region
      // Predicated region
      $region25: #{contrastive_forward.4} parent=23 // pred_check
        %p174 = pneg %p45
      $region26: #{contrastive_forward.4} parent=23 // pred_check_branch
        %176 = sbr.rel (%p174) target = $region28
      $region27: #{contrastive_forward.4} parent=23 // pred_region
        %p177 = scmp.lt.s32.totalorder %s18, 1
        %s178 = scalar_select %p177, %s18, 1
        %p179 = scmp.lt.s32.totalorder %s19, 0
        %s180 = scalar_select %p179, %s19, 0
        %s181 = smul.addr %s178, 7
        %s182 = sadd.s32 %s180, %s181
        %s183 = smul.addr %s182, 4
        %s184 = scalar_lea.vmem %s0, %s183
      $region28: #{contrastive_forward.4} parent=23 // pred_fallthru
        _
    $region24: #{contrastive_forward.4} parent=5 // pred_fallthru
      _
    %p185 = scmp.le.s32.totalorder 1, %s11
    %p186 = scmp.lt.s32.totalorder %s11, 3
    %p187 = pnand %p185, %p186
    %p188 = pneg %p187
    // Predicated region
    $region29: #{contrastive_forward.4} parent=5 // pred_check
      _
    $region30: #{contrastive_forward.4} parent=5 // pred_check_branch
      %190 = sbr.rel (%p187) target = $region32
    $region31: #{contrastive_forward.4} parent=5 // pred_region
      %s191 = ssub.s32 %s11, 1
      %p192 = scmp.lt.s32.totalorder %s20, 1
      %s193 = scalar_select %p192, %s20, 1
      %p194 = scmp.lt.s32.totalorder %s21, 0
      %s195 = scalar_select %p194, %s21, 0
      %s196 = smul.addr %s193, 7
      %s197 = sadd.s32 %s195, %s196
      %s198 = smul.addr %s197, 4
      %s199 = scalar_lea.vmem %s0, %s198
      %p200 = pneg %p51
      %p201 = pneg %p48
      %p202 = pneg %p72
      %p203 = pneg %p69
      %p204 = pneg %p93
      %p205 = pneg %p90
      %p206 = pneg %p121
      %p207 = pneg %p118
      %p208 = scmp.lt.s32.totalorder %s20, 1
      %s209 = scalar_select %p208, %s20, 1
      %p210 = scmp.lt.s32.totalorder %s21, 0
      %s211 = scalar_select %p210, %s21, 0
      %s212 = smul.addr %s209, 2
      %s213 = sadd.s32 %s211, %s212
      %s214 = smul.addr %s213, 8
      %s215 = scalar_lea.vmem %s3, %s214
      %p216 = pneg %p149
      %p217 = pneg %p146
      %p218 = scmp.lt.s32.totalorder %s20, 1
      %s219 = scalar_select %p218, %s20, 1
      %p220 = scmp.lt.s32.totalorder %s21, 0
      %s221 = scalar_select %p220, %s21, 0
      %s222 = smul.addr %s221, 2
      %s223 = smul.addr %s219, 2
      %s224 = sadd.s32 %s222, %s223
      %s225 = smul.addr %s224, 8
      %s226 = scalar_lea.vmem %s4, %s225
      %p227 = scmp.lt.s32.totalorder %s20, 1
      %s228 = scalar_select %p227, %s20, 1
      %p229 = scmp.lt.s32.totalorder %s21, 0
      %s230 = scalar_select %p229, %s21, 0
      %s231 = smul.addr %s228, 7
      %s232 = sadd.s32 %s230, %s231
      %s233 = smul.addr %s232, 4
      %s234 = scalar_lea.vmem %s0, %s233
      %p235 = scmp.lt.s32.totalorder %s20, 1
      %s236 = scalar_select %p235, %s20, 1
      %p237 = scmp.lt.s32.totalorder %s21, 0
      %s238 = scalar_select %p237, %s21, 0
      %s239 = smul.addr %s236, 2
      %s240 = sadd.s32 %s238, %s239
      %s241 = smul.addr %s240, 8
      %s242 = scalar_lea.vmem %s3, %s241
      %p243 = scmp.lt.s32.totalorder %s20, 1
      %s244 = scalar_select %p243, %s20, 1
      %p245 = scmp.lt.s32.totalorder %s21, 0
      %s246 = scalar_select %p245, %s21, 0
      %s247 = smul.addr %s246, 2
      %s248 = smul.addr %s244, 2
      %s249 = sadd.s32 %s247, %s248
      %s250 = smul.addr %s249, 8
      %s251 = scalar_lea.vmem %s4, %s250
      %v253 = vld [vmem:[%s1] sm:$0xf]
      %v254 = vld [vmem:[%s1 + $0x4] sm:$0xf]
      %v255 = vld [vmem:[%s234] sm:$0xf]
      %v256 = vld [vmem:[%s234 + $0x4] sm:$0xf]
      %v257 = vld [vmem:[%s234 + $0x8] sm:$0xf]
      %v258 = vld [vmem:[%s234 + $0xc] sm:$0xf]
      %v259 = vld [vmem:[%s234 + $0x10] sm:$0xf]
      %v260 = vld [vmem:[%s234 + $0x14] sm:$0xf]
      %v261 = vld [vmem:[%s234 + $0x18] sm:$0x1]
      %v262 = vld [vmem:[%s2] sm:$0xff]
      %v263 = vld [vmem:[%s2 + $0x8] sm:$0xff]
      %265 = vset.pattern.permute.xlu0 0
      %266 = vperm.xlu0 %265, %v262
      %v267 = vpop.permute.xlu0 %266
      %270 = vset.pattern.permute.xlu0 0
      %271 = vperm.xlu0 %270, %v263
      %v272 = vpop.permute.xlu0 %271
      %v276 = vunpack.c.l.b16 %v253
      %v277 = vunpack.c.l.b16 %v254
      %v278 = vpack.c.b16 %v277, %v276
      %v286 = vunpack.c.l.b16 %v255
      %v287 = vunpack.c.l.b16 %v256
      %v288 = vunpack.c.l.b16 %v257
      %v289 = vunpack.c.l.b16 %v258
      %v290 = vunpack.c.l.b16 %v259
      %v291 = vunpack.c.l.b16 %v260
      %v292 = vunpack.c.l.b16 %v261
      %v293 = vpack.c.b16 %v287, %v286
      %v294 = vpack.c.b16 %v289, %v288
      %v295 = vpack.c.b16 %v291, %v290
      %v296 = vpack.c.b16 %v292, %v292
      %vm300 = vcmask 400384
      %v302 = vsel %vm300, %v278, 0
      %vm304 = vcmask 1040384
      %v305 = vsel 0, 4294967295, 65535
      %v306 = vsel %vm304, %v305, 0
      %v308 = vand.u32 %v296, %v306
      %310 = vmatprep.subr.bf16.mxu0 0
      %311 = vmatpush1.bf16.msra.mxu0 0
      %312 = vmatprep.subr.bf16.mxu0 0
      %313 = vmatpush1.bf16.msra.mxu0 0
      %314 = vmatprep.subr.bf16.mxu0 0
      %315 = vmatpush1.bf16.msra.mxu0 0
      %316 = vmatprep.subr.bf16.mxu0 0
      %317 = vmatpush1.bf16.msra.mxu0 0
      %318 = vmatprep.subr.bf16.mxu0 0
      %319 = vmatpush1.bf16.msra.mxu0 %v308
      %320 = vmatprep.subr.bf16.mxu0 0
      %321 = vmatpush1.bf16.msra.mxu0 %v295
      %322 = vmatprep.subr.bf16.mxu0 0
      %323 = vmatpush1.bf16.msra.mxu0 %v294
      %324 = vmatprep.subr.bf16.mxu0 0
      %325 = vmatpush1.bf16.msra.mxu0 %v293
      %326 = vmatprep.subr.bf16.mxu0 0
      %327 = vmatpush2.bf16.msra.mxu0 0
      %328 = vmatprep.subr.bf16.mxu0 0
      %329 = vmatpush2.bf16.msra.mxu0 0
      %330 = vmatprep.subr.bf16.mxu0 0
      %331 = vmatpush2.bf16.msra.mxu0 0
      %332 = vmatprep.subr.bf16.mxu0 0
      %333 = vmatpush2.bf16.msra.mxu0 0
      %334 = vmatprep.subr.bf16.mxu0 0
      %335 = vmatpush2.bf16.msra.mxu0 0
      %336 = vmatprep.subr.bf16.mxu0 0
      %337 = vmatpush2.bf16.msra.mxu0 0
      %338 = vmatprep.subr.bf16.mxu0 0
      %339 = vmatpush2.bf16.msra.mxu0 0
      %340 = vmatprep.subr.bf16.mxu0 0
      %341 = vmatpush2.bf16.msra.mxu0 0
      %342 = vmatprep.mubr.bf16.mxu0 0
      %343 = vmatmul.mubr.bf16.gmra.mxu0 %v302
      %v344 = vpop.f32.mrf.mxu0
      %v345 = vadd.f32 %v267, %v344
      %v346 = vpop.f32.mrf.mxu0
      %v347 = vpop.f32.mrf.mxu0
      %v348 = vadd.f32 %v272, %v347
      %v349 = vpop.f32.mrf.mxu0
      %350 = vdwg.mxu0
      %v351 = vmax.f32 %v345, 0.0
      %v352 = vmax.f32 %v348, 0.0
      %v353 = vlaneseq
      %v354 = vand.u32 %v353, 127
      %s355 = smul.u32 %s21, 64
      %s356 = ssub.s32 64, %s355
      %v357 = vstv %s356
      %vm358 = vcmp.lt.s32.totalorder %v354, %v357
      %v359 = vsel %vm358, %v351, 0.0
      %v360 = vsel %vm358, %v352, 0.0
      %vm361 = vcmask 523264
      %362 = vst.msk [vmem:[%s242] sm:$0xff] %vm361, %v351
      %363 = vst.msk [vmem:[%s242 + $0x8] sm:$0xff] %vm361, %v352
      %v364 = vsel %vm361, %v359, 0.0
      %365 = vadd.xlane.f32.xlu0 %v364
      %v366 = vpop.xlane.xlu0 %365
      %v367 = vsel %vm361, %v360, 0.0
      %368 = vadd.xlane.f32.xlu0 %v367
      %v369 = vpop.xlane.xlu0 %368
      %v370 = vmul.f32 %v359, %v359
      %v371 = vmul.f32 %v360, %v360
      %v372 = vsel %vm361, %v370, 0.0
      %373 = vadd.xlane.f32.xlu0 %v372
      %v374 = vpop.xlane.xlu0 %373
      %v375 = vsel %vm361, %v371, 0.0
      %376 = vadd.xlane.f32.xlu0 %v375
      %v377 = vpop.xlane.xlu0 %376
      %vm378 = vcmask 7168
      %v379 = vsel %vm378, %v366, %v374
      %v380 = vsel %vm378, %v369, %v377
      %vm381 = vcmask 15360
      %382 = vst.msk [vmem:[%s251] sm:$0xff] %vm381, %v379
      %383 = vst.msk [vmem:[%s251 + $0x8] sm:$0xff] %vm381, %v380
      %p384 = scmp.lt.s32.totalorder %s20, 1
      %s385 = scalar_select %p384, %s20, 1
      %p386 = scmp.lt.s32.totalorder %s21, 0
      %s387 = scalar_select %p386, %s21, 0
      %s388 = smul.addr %s385, 2
      %s389 = sadd.s32 %s387, %s388
      %s390 = smul.addr %s389, 8
      %s391 = scalar_lea.vmem %s3, %s390
      %p392 = scmp.lt.s32.totalorder %s20, 1
      %s393 = scalar_select %p392, %s20, 1
      %p394 = scmp.lt.s32.totalorder %s21, 0
      %s395 = scalar_select %p394, %s21, 0
      %s396 = smul.addr %s395, 2
      %s397 = smul.addr %s393, 2
      %s398 = sadd.s32 %s396, %s397
      %s399 = smul.addr %s398, 8
      %s400 = scalar_lea.vmem %s4, %s399
      // Predicated region
      $region33: #{contrastive_forward.4} parent=31 // pred_check
        %p401 = pneg %p118
      $region34: #{contrastive_forward.4} parent=31 // pred_check_branch
        %403 = sbr.rel (%p401) target = $region36
      $region35: #{contrastive_forward.4} parent=31 // pred_region
        _
      $region36: #{contrastive_forward.4} parent=31 // pred_fallthru
        _
      // Predicated region
      $region37: #{contrastive_forward.4} parent=31 // pred_check
        %p404 = pneg %p146
      $region38: #{contrastive_forward.4} parent=31 // pred_check_branch
        %406 = sbr.rel (%p404) target = $region40
      $region39: #{contrastive_forward.4} parent=31 // pred_region
        _
      $region40: #{contrastive_forward.4} parent=31 // pred_fallthru
        _
    $region32: #{contrastive_forward.4} parent=5 // pred_fallthru
      _
    %p407 = scmp.le.s32.totalorder 2, %s11
    // Predicated region
    $region41: #{contrastive_forward.4} parent=5 // pred_check
      %p408 = pneg %p407
    $region42: #{contrastive_forward.4} parent=5 // pred_check_branch
      %410 = sbr.rel (%p408) target = $region44
    $region43: #{contrastive_forward.4} parent=5 // pred_region
      %s411 = ssub.s32 %s11, 2
      // Predicated region
      $region45: #{contrastive_forward.4} parent=43 // pred_check
        %p412 = pneg %p124
      $region46: #{contrastive_forward.4} parent=43 // pred_check_branch
        %414 = sbr.rel (%p412) target = $region48
      $region47: #{contrastive_forward.4} parent=43 // pred_region
        %p415 = scmp.lt.s32.totalorder %s22, 1
        %s416 = scalar_select %p415, %s22, 1
        %p417 = scmp.lt.s32.totalorder %s23, 0
        %s418 = scalar_select %p417, %s23, 0
        %s419 = smul.addr %s416, 2
        %s420 = sadd.s32 %s418, %s419
        %s421 = smul.addr %s420, 8
        %s422 = scalar_lea.vmem %s3, %s421
      $region48: #{contrastive_forward.4} parent=43 // pred_fallthru
        _
      // Predicated region
      $region49: #{contrastive_forward.4} parent=43 // pred_check
        %p423 = pneg %p152
      $region50: #{contrastive_forward.4} parent=43 // pred_check_branch
        %425 = sbr.rel (%p423) target = $region52
      $region51: #{contrastive_forward.4} parent=43 // pred_region
        %p426 = scmp.lt.s32.totalorder %s22, 1
        %s427 = scalar_select %p426, %s22, 1
        %p428 = scmp.lt.s32.totalorder %s23, 0
        %s429 = scalar_select %p428, %s23, 0
        %s430 = smul.addr %s429, 2
        %s431 = smul.addr %s427, 2
        %s432 = sadd.s32 %s430, %s431
        %s433 = smul.addr %s432, 8
        %s434 = scalar_lea.vmem %s4, %s433
      $region52: #{contrastive_forward.4} parent=43 // pred_fallthru
        _
    $region44: #{contrastive_forward.4} parent=5 // pred_fallthru
      _
  $region6: #{contrastive_forward.4} parent=0 // loop_footer
    %s15 = sadd.s32 1, %s11
  $region7: #{contrastive_forward.4} parent=0 // loop_footer_branch
    %10 = sbr.rel target = $region3
  $region8: #{contrastive_forward.4} parent=0 // loop_exit
    _

// kernel: contrastive_forward.7
$region0: #{contrastive_forward.7}
  #allocation0 [shape = 'u32[]', space=smem, size = 0x4, offset = 0x4, fixed_abs, tag = 'smem constant byte address 0x4 - core index']
  #allocation1 [shape = 'u32[144,128]{1,0:T(1,128)}', space=vmem, size = 0x12000, scoped, tag = 'internal scratch']
  %s0 = inlined_call_operand.vmem [shape: f32[2,32], index: 0, kind: input, shape index: {}]
  %s1 = inlined_call_operand.vmem [shape: f32[1,32], index: 1, kind: input, shape index: {}]
  %s2 = inlined_call_operand.vmem [shape: f32[1,32], index: 2, kind: input, shape index: {}]
  %s3 = inlined_call_operand.vmem [shape: f32[32,2], index: 3, kind: input, shape index: {}]
  %s4 = inlined_call_operand.vmem [shape: f32[1,2], index: 4, kind: input, shape index: {}]
  %s5 = inlined_call_operand.hbm [shape: f32[2,2], index: 5, kind: output, shape index: {}]
  %s6 = sld [smem:[#allocation0]]
  $region30: #{contrastive_forward.7} parent=0
    _
  %s8 = ssub.s32 1, %s6
  %s9 = scalar_select 0, %s8, %s6
  $region1: #{contrastive_forward.7} parent=0
    #allocation2 [shape = 'u8[1024]{0}', space=vmem, size = 0x400, scoped, tag = 'output window, operand 0, single buffered']
    #allocation3 [shape = 's32[1]{0}', space=sflag, size = 0x4, scoped, tag = 'scoped memory for contrastive_forward.7']
    %10 = vsyncpa [#allocation3], 0
    // Predicated region
    $region2: #{contrastive_forward.7} parent=1 // pred_check
      _
    $region3: #{contrastive_forward.7} parent=1 // pred_check_branch
      %12 = sbr.rel (0) target = $region5
    $region4: #{contrastive_forward.7} parent=1 // pred_region
      _
    $region5: #{contrastive_forward.7} parent=1 // pred_fallthru
      _
    // Predicated region
    $region6: #{contrastive_forward.7} parent=1 // pred_check
      _
    $region7: #{contrastive_forward.7} parent=1 // pred_check_branch
      %14 = sbr.rel (0) target = $region9
    $region8: #{contrastive_forward.7} parent=1 // pred_region
      _
    $region9: #{contrastive_forward.7} parent=1 // pred_fallthru
      _
    // Predicated region
    $region10: #{contrastive_forward.7} parent=1 // pred_check
      _
    $region11: #{contrastive_forward.7} parent=1 // pred_check_branch
      %16 = sbr.rel (0) target = $region13
    $region12: #{contrastive_forward.7} parent=1 // pred_region
      _
    $region13: #{contrastive_forward.7} parent=1 // pred_fallthru
      _
    // Predicated region
    $region14: #{contrastive_forward.7} parent=1 // pred_check
      _
    $region15: #{contrastive_forward.7} parent=1 // pred_check_branch
      %18 = sbr.rel (0) target = $region17
    $region16: #{contrastive_forward.7} parent=1 // pred_region
      _
    $region17: #{contrastive_forward.7} parent=1 // pred_fallthru
      _
    // Predicated region
    $region18: #{contrastive_forward.7} parent=1 // pred_check
      _
    $region19: #{contrastive_forward.7} parent=1 // pred_check_branch
      %20 = sbr.rel (0) target = $region21
    $region20: #{contrastive_forward.7} parent=1 // pred_region
      _
    $region21: #{contrastive_forward.7} parent=1 // pred_fallthru
      _
    %v21 = vld [vmem:[%s0] sm:$0x3]
    %v22 = vld [vmem:[%s1] sm:$0x1]
    %v24 = vlaneseq
    %v25 = vshrl.u32 %v24, 7
    %v26 = vsub.s32 0, %v25
    %v27 = vrot.slane %v22, %v26
    %v29 = vmul.f32 %v21, %v27
    %v30 = vld [vmem:[%s2] sm:$0x1]
    %v32 = vlaneseq
    %v33 = vshrl.u32 %v32, 7
    %v34 = vsub.s32 0, %v33
    %v35 = vrot.slane %v30, %v34
    %v37 = vadd.f32 %v29, %v35
    %v38 = vld [vmem:[%s3] sm:$0xff]
    %v39 = vld [vmem:[%s3 + $0x8] sm:$0xff]
    %v40 = vld [vmem:[%s3 + $0x10] sm:$0xff]
    %v41 = vld [vmem:[%s3 + $0x18] sm:$0xff]
    %v42 = vld [vmem:[%s4] sm:$0x1]
    %v44 = vlaneseq
    %v45 = vshrl.u32 %v44, 7
    %v46 = vsub.s32 0, %v45
    %v47 = vrot.slane %v42, %v46
    %vm49 = vcmask 261120
    %v51 = vsel %vm49, %v37, 0
    %53 = vmatprep.subr.mxu0 0.0
    %54 = vmatpush1.msra.mxu0 0.0
    %55 = vmatprep.subr.mxu0 0.0
    %56 = vmatpush1.msra.mxu0 0.0
    %57 = vmatprep.subr.mxu0 0.0
    %58 = vmatpush1.msra.mxu0 0.0
    %59 = vmatprep.subr.mxu0 0.0
    %60 = vmatpush1.msra.mxu0 0.0
    %61 = vmatprep.subr.mxu0 0.0
    %62 = vmatpush1.msra.mxu0 0.0
    %63 = vmatprep.subr.mxu0 0.0
    %64 = vmatpush1.msra.mxu0 0.0
    %65 = vmatprep.subr.mxu0 0.0
    %66 = vmatpush1.msra.mxu0 0.0
    %67 = vmatprep.subr.mxu0 0.0
    %68 = vmatpush1.msra.mxu0 0.0
    %69 = vmatprep.subr.mxu0 0.0
    %70 = vmatpush1.msra.mxu0 0.0
    %71 = vmatprep.subr.mxu0 0.0
    %72 = vmatpush1.msra.mxu0 0.0
    %73 = vmatprep.subr.mxu0 0.0
    %74 = vmatpush1.msra.mxu0 0.0
    %75 = vmatprep.subr.mxu0 0.0
    %76 = vmatpush1.msra.mxu0 0.0
    %77 = vmatprep.subr.mxu0 0.0
    %78 = vmatpush1.msra.mxu0 %v41
    %79 = vmatprep.subr.mxu0 0.0
    %80 = vmatpush1.msra.mxu0 %v40
    %81 = vmatprep.subr.mxu0 0.0
    %82 = vmatpush1.msra.mxu0 %v39
    %83 = vmatprep.subr.mxu0 0.0
    %84 = vmatpush1.msra.mxu0 %v38
    %85 = vmatprep.subr.mxu0 0.0
    %86 = vmatpush2.msra.mxu0 0.0
    %87 = vmatprep.subr.mxu0 0.0
    %88 = vmatpush2.msra.mxu0 0.0
    %89 = vmatprep.subr.mxu0 0.0
    %90 = vmatpush2.msra.mxu0 0.0
    %91 = vmatprep.subr.mxu0 0.0
    %92 = vmatpush2.msra.mxu0 0.0
    %93 = vmatprep.subr.mxu0 0.0
    %94 = vmatpush2.msra.mxu0 0.0
    %95 = vmatprep.subr.mxu0 0.0
    %96 = vmatpush2.msra.mxu0 0.0
    %97 = vmatprep.subr.mxu0 0.0
    %98 = vmatpush2.msra.mxu0 0.0
    %99 = vmatprep.subr.mxu0 0.0
    %100 = vmatpush2.msra.mxu0 0.0
    %101 = vmatprep.subr.mxu0 0.0
    %102 = vmatpush2.msra.mxu0 0.0
    %103 = vmatprep.subr.mxu0 0.0
    %104 = vmatpush2.msra.mxu0 0.0
    %105 = vmatprep.subr.mxu0 0.0
    %106 = vmatpush2.msra.mxu0 0.0
    %107 = vmatprep.subr.mxu0 0.0
    %108 = vmatpush2.msra.mxu0 0.0
    %109 = vmatprep.subr.mxu0 0.0
    %110 = vmatpush2.msra.mxu0 0.0
    %111 = vmatprep.subr.mxu0 0.0
    %112 = vmatpush2.msra.mxu0 0.0
    %113 = vmatprep.subr.mxu0 0.0
    %114 = vmatpush2.msra.mxu0 0.0
    %115 = vmatprep.subr.mxu0 0.0
    %116 = vmatpush2.msra.mxu0 0.0
    %117 = vmatprep.mubr.f32.mxu0 0.0
    %118 = vmatmul.mubr.f32.gmra.mxu0 %v51
    %v119 = vpop.f32.mrf.mxu0
    %v120 = vadd.f32 %v47, %v119
    %v121 = vpop.f32.mrf.mxu0
    %122 = vdwg.mxu0
    %vm123 = vcmask 9216
    %124 = vst.msk [vmem:[#allocation2] sm:$0x3] %vm123, %v120
    // Predicated region
    $region22: #{contrastive_forward.7} parent=1 // pred_check
      _
    $region23: #{contrastive_forward.7} parent=1 // pred_check_branch
      %126 = sbr.rel (0) target = $region25
    $region24: #{contrastive_forward.7} parent=1 // pred_region
      %s128 = ssub.s32 32, 32
      %129 = vsyncadd [#allocation3], %s128
      %s131 = sshll.u32 [#allocation2], 4
      %s132 = int_to_ptr.vmem [resolvable:$true] %s131
      %134 = dma.vmem_to_hbm [thread:$0]  %s132, 32, %s5, [#allocation3]
    $region25: #{contrastive_forward.7} parent=1 // pred_fallthru
      _
    // Predicated region
    $region26: #{contrastive_forward.7} parent=1 // pred_check
      _
    $region27: #{contrastive_forward.7} parent=1 // pred_check_branch
      %136 = sbr.rel (0) target = $region29
    $region28: #{contrastive_forward.7} parent=1 // pred_region
      %137 = dma.done [#allocation3], 32
    $region29: #{contrastive_forward.7} parent=1 // pred_fallthru
      _
    %138 = vsyncpa [#allocation3], 1

// kernel: contrastive_forward.6
$region0: #{contrastive_forward.6}
  #allocation0 [shape = 'u32[]', space=smem, size = 0x4, offset = 0x4, fixed_abs, tag = 'smem constant byte address 0x4 - core index']
  #allocation1 [shape = 'u32[144,128]{1,0:T(1,128)}', space=vmem, size = 0x12000, scoped, tag = 'internal scratch']
  %s0 = inlined_call_operand.vmem [shape: bf16[2,400,16], index: 0, kind: input, shape index: {}]
  %s1 = inlined_call_operand.vmem [shape: bf16[32,400], index: 1, kind: input, shape index: {}]
  %s2 = inlined_call_operand.vmem [shape: f32[32,1], index: 2, kind: input, shape index: {}]
  %s3 = inlined_call_operand.vmem [shape: f32[2,1,32,2], index: 3, kind: output, shape index: {}]
  %s4 = sld [smem:[#allocation0]]
  $region45: #{contrastive_forward.6} parent=0
    _
  %s6 = ssub.s32 1, %s4
  %s7 = scalar_select 0, %s6, %s4
  loop: start=0, step=1, limit=4
  $region2: #{contrastive_forward.6} parent=0 // loop_pre_header
    _
  $region3: #{contrastive_forward.6} parent=0 // loop_header
    %s9 = sphi 0, %s13
    %p10 = scmp.ge.s32.totalorder %s9, 4
    %s16 = sphi 0, %s28
    %s17 = sphi 0, %s24
    %s18 = sphi 0, %s16
    %s19 = sphi 0, %s17
    %s20 = sphi 0, %s18
    %s21 = sphi 0, %s19
    %s33 = sphi 0, %s35
    %s36 = sphi 0, %s33
    %s37 = sphi 0, %s36
    %s53 = sphi 0, %s37
    %s57 = sphi 0, %s57
    %s59 = sphi 0, %s57
    %s60 = sphi 0, %s59
    %s74 = sphi 0, %s60
    %s78 = sphi 0, %s78
    %s80 = sphi 0, %s78
    %s81 = sphi 0, %s80
    %s95 = sphi 0, %s81
    %s103 = sphi 0, %s105
    %s106 = sphi 0, %s103
    %s107 = sphi 0, %s106
    %s123 = sphi 0, %s107
  $region4: #{contrastive_forward.6} parent=0 // loop_header_branch
    %12 = sbr.rel (%p10) target = $region8
  $region5: #{contrastive_forward.6} parent=0 // loop_body
    %s14 = ssub.s32 %s9, 1
    %s15 = ssub.s32 %s9, 2
    %s22 = sadd.s32 1, %s17
    %p23 = scmp.ge.s32.totalorder %s22, 1
    %s24 = scalar_select %p23, 0, %s22
    %s25 = sadd.s32 1, %s16
    %s26 = scalar_select %p23, %s25, %s16
    %p27 = scmp.ge.s32.totalorder %s26, 2
    %s28 = scalar_select %p27, 0, %s26
    %s29 = ssub.s32 %s16, %s28
    %s30 = ssub.s32 %s17, %s24
    %s31 = sor.u32 %s29, %s30
    %p32 = scmp.eq.s32.totalorder %s31, 0
    %s34 = sadd.s32 %s33, 1
    %s35 = scalar_select %p32, %s33, %s34
    %p38 = pneg %p32
    %p39 = scmp.eq.s32.totalorder %s9, 1
    %p40 = por %p38, %p39
    %p41 = scmp.ne.s32.totalorder %s33, %s36
    %p42 = scmp.eq.s32.totalorder %s9, 0
    %p43 = por %p41, %p42
    %p44 = scmp.ne.s32.totalorder %s33, %s36
    %p45 = scmp.eq.s32.totalorder %s14, 1
    %p46 = por %p44, %p45
    %p47 = scmp.ne.s32.totalorder %s36, %s37
    %p48 = scmp.eq.s32.totalorder %s14, 0
    %p49 = por %p47, %p48
    %p50 = scmp.ne.s32.totalorder %s36, %s37
    %p51 = scmp.eq.s32.totalorder %s15, 1
    %p52 = por %p50, %p51
    %p54 = scmp.ne.s32.totalorder %s37, %s53
    %p55 = scmp.eq.s32.totalorder %s15, 0
    %p56 = por %p54, %p55
    %s58 = sadd.s32 %s57, 1
    %p61 = scmp.eq.s32.totalorder %s9, 1
    %p62 = scmp.ne.s32.totalorder %s57, %s59
    %p63 = scmp.eq.s32.totalorder %s9, 0
    %p64 = por %p62, %p63
    %p65 = scmp.ne.s32.totalorder %s57, %s59
    %p66 = scmp.eq.s32.totalorder %s14, 1
    %p67 = por %p65, %p66
    %p68 = scmp.ne.s32.totalorder %s59, %s60
    %p69 = scmp.eq.s32.totalorder %s14, 0
    %p70 = por %p68, %p69
    %p71 = scmp.ne.s32.totalorder %s59, %s60
    %p72 = scmp.eq.s32.totalorder %s15, 1
    %p73 = por %p71, %p72
    %p75 = scmp.ne.s32.totalorder %s60, %s74
    %p76 = scmp.eq.s32.totalorder %s15, 0
    %p77 = por %p75, %p76
    %s79 = sadd.s32 %s78, 1
    %p82 = scmp.eq.s32.totalorder %s9, 1
    %p83 = scmp.ne.s32.totalorder %s78, %s80
    %p84 = scmp.eq.s32.totalorder %s9, 0
    %p85 = por %p83, %p84
    %p86 = scmp.ne.s32.totalorder %s78, %s80
    %p87 = scmp.eq.s32.totalorder %s14, 1
    %p88 = por %p86, %p87
    %p89 = scmp.ne.s32.totalorder %s80, %s81
    %p90 = scmp.eq.s32.totalorder %s14, 0
    %p91 = por %p89, %p90
    %p92 = scmp.ne.s32.totalorder %s80, %s81
    %p93 = scmp.eq.s32.totalorder %s15, 1
    %p94 = por %p92, %p93
    %p96 = scmp.ne.s32.totalorder %s81, %s95
    %p97 = scmp.eq.s32.totalorder %s15, 0
    %p98 = por %p96, %p97
    %s99 = ssub.s32 %s16, %s28
    %s100 = ssub.s32 %s17, %s24
    %s101 = sor.u32 %s99, %s100
    %p102 = scmp.eq.s32.totalorder %s101, 0
    %s104 = sadd.s32 %s103, 1
    %s105 = scalar_select %p102, %s103, %s104
    %p108 = pneg %p102
    %p109 = scmp.eq.s32.totalorder %s9, 1
    %p110 = por %p108, %p109
    %p111 = scmp.ne.s32.totalorder %s103, %s106
    %p112 = scmp.eq.s32.totalorder %s9, 0
    %p113 = por %p111, %p112
    %p114 = scmp.ne.s32.totalorder %s103, %s106
    %p115 = scmp.eq.s32.totalorder %s14, 1
    %p116 = por %p114, %p115
    %p117 = scmp.ne.s32.totalorder %s106, %s107
    %p118 = scmp.eq.s32.totalorder %s14, 0
    %p119 = por %p117, %p118
    %p120 = scmp.ne.s32.totalorder %s106, %s107
    %p121 = scmp.eq.s32.totalorder %s15, 1
    %p122 = por %p120, %p121
    %p124 = scmp.ne.s32.totalorder %s107, %s123
    %p125 = scmp.eq.s32.totalorder %s15, 0
    %p126 = por %p124, %p125
    %p127 = scmp.le.s32.totalorder 1, %s9
    %p128 = scmp.lt.s32.totalorder %s9, 3
    %p129 = pnand %p127, %p128
    %p130 = pneg %p129
    // Predicated region
    $region9: #{contrastive_forward.6} parent=5 // pred_check
      _
    $region10: #{contrastive_forward.6} parent=5 // pred_check_branch
      %132 = sbr.rel (%p129) target = $region12
    $region11: #{contrastive_forward.6} parent=5 // pred_region
      %s133 = ssub.s32 %s9, 1
      // Predicated region
      $region13: #{contrastive_forward.6} parent=11 // pred_check
        %p134 = pneg %p70
      $region14: #{contrastive_forward.6} parent=11 // pred_check_branch
        %136 = sbr.rel (%p134) target = $region16
      $region15: #{contrastive_forward.6} parent=11 // pred_region
        _
      $region16: #{contrastive_forward.6} parent=11 // pred_fallthru
        _
      // Predicated region
      $region17: #{contrastive_forward.6} parent=11 // pred_check
        %p137 = pneg %p91
      $region18: #{contrastive_forward.6} parent=11 // pred_check_branch
        %139 = sbr.rel (%p137) target = $region20
      $region19: #{contrastive_forward.6} parent=11 // pred_region
        _
      $region20: #{contrastive_forward.6} parent=11 // pred_fallthru
        _
    $region12: #{contrastive_forward.6} parent=5 // pred_fallthru
      _
    %p140 = scmp.lt.s32.totalorder %s9, 2
    // Predicated region
    $region21: #{contrastive_forward.6} parent=5 // pred_check
      %p141 = pneg %p140
    $region22: #{contrastive_forward.6} parent=5 // pred_check_branch
      %143 = sbr.rel (%p141) target = $region24
    $region23: #{contrastive_forward.6} parent=5 // pred_region
      // Predicated region
      $region25: #{contrastive_forward.6} parent=23 // pred_check
        %p144 = pneg %p43
      $region26: #{contrastive_forward.6} parent=23 // pred_check_branch
        %146 = sbr.rel (%p144) target = $region28
      $region27: #{contrastive_forward.6} parent=23 // pred_region
        %p147 = scmp.lt.s32.totalorder %s16, 1
        %s148 = scalar_select %p147, %s16, 1
        %p149 = scmp.lt.s32.totalorder %s17, 0
        %s150 = scalar_select %p149, %s17, 0
        %s151 = smul.addr %s148, 50
        %s152 = sadd.s32 %s150, %s151
        %s153 = smul.addr %s152, 4
        %s154 = scalar_lea.vmem %s0, %s153
      $region28: #{contrastive_forward.6} parent=23 // pred_fallthru
        _
    $region24: #{contrastive_forward.6} parent=5 // pred_fallthru
      _
    %p155 = scmp.le.s32.totalorder 1, %s9
    %p156 = scmp.lt.s32.totalorder %s9, 3
    %p157 = pnand %p155, %p156
    %p158 = pneg %p157
    // Predicated region
    $region29: #{contrastive_forward.6} parent=5 // pred_check
      _
    $region30: #{contrastive_forward.6} parent=5 // pred_check_branch
      %160 = sbr.rel (%p157) target = $region32
    $region31: #{contrastive_forward.6} parent=5 // pred_region
      %s161 = ssub.s32 %s9, 1
      %p162 = scmp.lt.s32.totalorder %s18, 1
      %s163 = scalar_select %p162, %s18, 1
      %p164 = scmp.lt.s32.totalorder %s19, 0
      %s165 = scalar_select %p164, %s19, 0
      %s166 = smul.addr %s163, 50
      %s167 = sadd.s32 %s165, %s166
      %s168 = smul.addr %s167, 4
      %s169 = scalar_lea.vmem %s0, %s168
      %p170 = pneg %p49
      %p171 = pneg %p46
      %p172 = pneg %p70
      %p173 = pneg %p67
      %p174 = pneg %p91
      %p175 = pneg %p88
      %p176 = pneg %p119
      %p177 = pneg %p116
      %p178 = scmp.lt.s32.totalorder %s18, 1
      %s179 = scalar_select %p178, %s18, 1
      %p180 = scmp.lt.s32.totalorder %s19, 0
      %s181 = scalar_select %p180, %s19, 0
      %s182 = smul.addr %s181, 4
      %s183 = smul.addr %s179, 4
      %s184 = sadd.s32 %s182, %s183
      %s185 = smul.addr %s184, 8
      %s186 = scalar_lea.vmem %s3, %s185
      %p187 = scmp.lt.s32.totalorder %s18, 1
      %s188 = scalar_select %p187, %s18, 1
      %p189 = scmp.lt.s32.totalorder %s19, 0
      %s190 = scalar_select %p189, %s19, 0
      %s191 = smul.addr %s188, 50
      %s192 = sadd.s32 %s190, %s191
      %s193 = smul.addr %s192, 4
      %s194 = scalar_lea.vmem %s0, %s193
      %p195 = scmp.lt.s32.totalorder %s18, 1
      %s196 = scalar_select %p195, %s18, 1
      %p197 = scmp.lt.s32.totalorder %s19, 0
      %s198 = scalar_select %p197, %s19, 0
      %s199 = smul.addr %s198, 4
      %s200 = smul.addr %s196, 4
      %s201 = sadd.s32 %s199, %s200
      %s202 = smul.addr %s201, 8
      %s203 = scalar_lea.vmem %s3, %s202
      %v205 = vld [vmem:[%s1] sm:$0xff]
      %v206 = vld [vmem:[%s1 + $0x8] sm:$0xff]
      %v207 = vld [vmem:[%s1 + $0x10] sm:$0xff]
      %v208 = vld [vmem:[%s1 + $0x18] sm:$0xff]
      %v209 = vld [vmem:[%s1 + $0x20] sm:$0xff]
      %v210 = vld [vmem:[%s1 + $0x28] sm:$0xff]
      %v211 = vld [vmem:[%s1 + $0x30] sm:$0xff]
      %v212 = vld [vmem:[%s1 + $0x38] sm:$0xff]
      %v213 = vld [vmem:[%s194] sm:$0xf]
      %v214 = vld [vmem:[%s194 + $0x4] sm:$0xf]
      %v215 = vld [vmem:[%s194 + $0x8] sm:$0xf]
      %v216 = vld [vmem:[%s194 + $0xc] sm:$0xf]
      %v217 = vld [vmem:[%s194 + $0x10] sm:$0xf]
      %v218 = vld [vmem:[%s194 + $0x14] sm:$0xf]
      %v219 = vld [vmem:[%s194 + $0x18] sm:$0xf]
      %v220 = vld [vmem:[%s194 + $0x1c] sm:$0xf]
      %v221 = vld [vmem:[%s194 + $0x20] sm:$0xf]
      %v222 = vld [vmem:[%s194 + $0x24] sm:$0xf]
      %v223 = vld [vmem:[%s194 + $0x28] sm:$0xf]
      %v224 = vld [vmem:[%s194 + $0x2c] sm:$0xf]
      %v225 = vld [vmem:[%s194 + $0x30] sm:$0xf]
      %v226 = vld [vmem:[%s194 + $0x34] sm:$0xf]
      %v227 = vld [vmem:[%s194 + $0x38] sm:$0xf]
      %v228 = vld [vmem:[%s194 + $0x3c] sm:$0xf]
      %v229 = vld [vmem:[%s194 + $0x40] sm:$0xf]
      %v230 = vld [vmem:[%s194 + $0x44] sm:$0xf]
      %v231 = vld [vmem:[%s194 + $0x48] sm:$0xf]
      %v232 = vld [vmem:[%s194 + $0x4c] sm:$0xf]
      %v233 = vld [vmem:[%s194 + $0x50] sm:$0xf]
      %v234 = vld [vmem:[%s194 + $0x54] sm:$0xf]
      %v235 = vld [vmem:[%s194 + $0x58] sm:$0xf]
      %v236 = vld [vmem:[%s194 + $0x5c] sm:$0xf]
      %v237 = vld [vmem:[%s194 + $0x60] sm:$0xf]
      %v238 = vld [vmem:[%s194 + $0x64] sm:$0xf]
      %v239 = vld [vmem:[%s194 + $0x68] sm:$0xf]
      %v240 = vld [vmem:[%s194 + $0x6c] sm:$0xf]
      %v241 = vld [vmem:[%s194 + $0x70] sm:$0xf]
      %v242 = vld [vmem:[%s194 + $0x74] sm:$0xf]
      %v243 = vld [vmem:[%s194 + $0x78] sm:$0xf]
      %v244 = vld [vmem:[%s194 + $0x7c] sm:$0xf]
      %v245 = vld [vmem:[%s194 + $0x80] sm:$0xf]
      %v246 = vld [vmem:[%s194 + $0x84] sm:$0xf]
      %v247 = vld [vmem:[%s194 + $0x88] sm:$0xf]
      %v248 = vld [vmem:[%s194 + $0x8c] sm:$0xf]
      %v249 = vld [vmem:[%s194 + $0x90] sm:$0xf]
      %v250 = vld [vmem:[%s194 + $0x94] sm:$0xf]
      %v251 = vld [vmem:[%s194 + $0x98] sm:$0xf]
      %v252 = vld [vmem:[%s194 + $0x9c] sm:$0xf]
      %v253 = vld [vmem:[%s194 + $0xa0] sm:$0xf]
      %v254 = vld [vmem:[%s194 + $0xa4] sm:$0xf]
      %v255 = vld [vmem:[%s194 + $0xa8] sm:$0xf]
      %v256 = vld [vmem:[%s194 + $0xac] sm:$0xf]
      %v257 = vld [vmem:[%s194 + $0xb0] sm:$0xf]
      %v258 = vld [vmem:[%s194 + $0xb4] sm:$0xf]
      %v259 = vld [vmem:[%s194 + $0xb8] sm:$0xf]
      %v260 = vld [vmem:[%s194 + $0xbc] sm:$0xf]
      %v261 = vld [vmem:[%s194 + $0xc0] sm:$0xf]
      %v262 = vld [vmem:[%s194 + $0xc4] sm:$0xf]
      %v263 = vld [vmem:[%s2] sm:$0xff]
      %v264 = vld [vmem:[%s2 + $0x8] sm:$0xff]
      %v265 = vld [vmem:[%s2 + $0x10] sm:$0xff]
      %v266 = vld [vmem:[%s2 + $0x18] sm:$0xff]
      %268 = vset.pattern.permute.xlu0 0
      %269 = vperm.xlu0 %268, %v263
      %v270 = vpop.permute.xlu0 %269
      %273 = vset.pattern.permute.xlu0 0
      %274 = vperm.xlu0 %273, %v264
      %v275 = vpop.permute.xlu0 %274
      %278 = vset.pattern.permute.xlu0 0
      %279 = vperm.xlu0 %278, %v265
      %v280 = vpop.permute.xlu0 %279
      %283 = vset.pattern.permute.xlu0 0
      %284 = vperm.xlu0 %283, %v266
      %v285 = vpop.permute.xlu0 %284
      %v295 = vunpack.c.l.b16 %v205
      %v296 = vunpack.c.h.b16 %v205
      %v297 = vunpack.c.l.b16 %v206
      %v298 = vunpack.c.h.b16 %v206
      %v299 = vunpack.c.l.b16 %v207
      %v300 = vunpack.c.h.b16 %v207
      %v301 = vunpack.c.l.b16 %v208
      %v302 = vunpack.c.h.b16 %v208
      %v303 = vunpack.c.l.b16 %v209
      %v304 = vunpack.c.h.b16 %v209
      %v305 = vunpack.c.l.b16 %v210
      %v306 = vunpack.c.h.b16 %v210
      %v307 = vunpack.c.l.b16 %v211
      %v308 = vunpack.c.h.b16 %v211
      %v309 = vunpack.c.l.b16 %v212
      %v310 = vunpack.c.h.b16 %v212
      %v311 = vpack.c.b16 %v299, %v295
      %v312 = vpack.c.b16 %v300, %v296
      %v313 = vpack.c.b16 %v301, %v297
      %v314 = vpack.c.b16 %v302, %v298
      %v315 = vpack.c.b16 %v307, %v303
      %v316 = vpack.c.b16 %v308, %v304
      %v317 = vpack.c.b16 %v309, %v305
      %v318 = vpack.c.b16 %v310, %v306
      %v375 = vunpack.c.l.b16 %v213
      %v376 = vunpack.c.l.b16 %v214
      %v377 = vunpack.c.l.b16 %v215
      %v378 = vunpack.c.l.b16 %v216
      %v379 = vunpack.c.l.b16 %v217
      %v380 = vunpack.c.l.b16 %v218
      %v381 = vunpack.c.l.b16 %v219
      %v382 = vunpack.c.l.b16 %v220
      %v383 = vunpack.c.l.b16 %v221
      %v384 = vunpack.c.l.b16 %v222
      %v385 = vunpack.c.l.b16 %v223
      %v386 = vunpack.c.l.b16 %v224
      %v387 = vunpack.c.l.b16 %v225
      %v388 = vunpack.c.l.b16 %v226
      %v389 = vunpack.c.l.b16 %v227
      %v390 = vunpack.c.l.b16 %v228
      %v391 = vunpack.c.l.b16 %v229
      %v392 = vunpack.c.l.b16 %v230
      %v393 = vunpack.c.l.b16 %v231
      %v394 = vunpack.c.l.b16 %v232
      %v395 = vunpack.c.l.b16 %v233
      %v396 = vunpack.c.l.b16 %v234
      %v397 = vunpack.c.l.b16 %v235
      %v398 = vunpack.c.l.b16 %v236
      %v399 = vunpack.c.l.b16 %v237
      %v400 = vunpack.c.l.b16 %v238
      %v401 = vunpack.c.l.b16 %v239
      %v402 = vunpack.c.l.b16 %v240
      %v403 = vunpack.c.l.b16 %v241
      %v404 = vunpack.c.l.b16 %v242
      %v405 = vunpack.c.l.b16 %v243
      %v406 = vunpack.c.l.b16 %v244
      %v407 = vunpack.c.l.b16 %v245
      %v408 = vunpack.c.l.b16 %v246
      %v409 = vunpack.c.l.b16 %v247
      %v410 = vunpack.c.l.b16 %v248
      %v411 = vunpack.c.l.b16 %v249
      %v412 = vunpack.c.l.b16 %v250
      %v413 = vunpack.c.l.b16 %v251
      %v414 = vunpack.c.l.b16 %v252
      %v415 = vunpack.c.l.b16 %v253
      %v416 = vunpack.c.l.b16 %v254
      %v417 = vunpack.c.l.b16 %v255
      %v418 = vunpack.c.l.b16 %v256
      %v419 = vunpack.c.l.b16 %v257
      %v420 = vunpack.c.l.b16 %v258
      %v421 = vunpack.c.l.b16 %v259
      %v422 = vunpack.c.l.b16 %v260
      %v423 = vunpack.c.l.b16 %v261
      %v424 = vunpack.c.l.b16 %v262
      %v425 = vpack.c.b16 %v376, %v375
      %v426 = vpack.c.b16 %v378, %v377
      %v427 = vpack.c.b16 %v380, %v379
      %v428 = vpack.c.b16 %v382, %v381
      %v429 = vpack.c.b16 %v384, %v383
      %v430 = vpack.c.b16 %v386, %v385
      %v431 = vpack.c.b16 %v388, %v387
      %v432 = vpack.c.b16 %v390, %v389
      %v433 = vpack.c.b16 %v392, %v391
      %v434 = vpack.c.b16 %v394, %v393
      %v435 = vpack.c.b16 %v396, %v395
      %v436 = vpack.c.b16 %v398, %v397
      %v437 = vpack.c.b16 %v400, %v399
      %v438 = vpack.c.b16 %v402, %v401
      %v439 = vpack.c.b16 %v404, %v403
      %v440 = vpack.c.b16 %v406, %v405
      %v441 = vpack.c.b16 %v408, %v407
      %v442 = vpack.c.b16 %v410, %v409
      %v443 = vpack.c.b16 %v412, %v411
      %v444 = vpack.c.b16 %v414, %v413
      %v445 = vpack.c.b16 %v416, %v415
      %v446 = vpack.c.b16 %v418, %v417
      %v447 = vpack.c.b16 %v420, %v419
      %v448 = vpack.c.b16 %v422, %v421
      %v449 = vpack.c.b16 %v424, %v423
      %vm475 = vcmask 130048
      %v477 = vsel %vm475, %v314, 0
      %v480 = vsel %vm475, %v318, 0
      %482 = vmatprep.subr.bf16.mxu0 0
      %483 = vmatpush1.bf16.msra.mxu0 %v432
      %484 = vmatprep.subr.bf16.mxu0 0
      %485 = vmatpush1.bf16.msra.mxu0 %v431
      %486 = vmatprep.subr.bf16.mxu0 0
      %487 = vmatpush1.bf16.msra.mxu0 %v430
      %488 = vmatprep.subr.bf16.mxu0 0
      %489 = vmatpush1.bf16.msra.mxu0 %v429
      %490 = vmatprep.subr.bf16.mxu0 0
      %491 = vmatpush1.bf16.msra.mxu0 %v428
      %492 = vmatprep.subr.bf16.mxu0 0
      %493 = vmatpush1.bf16.msra.mxu0 %v427
      %494 = vmatprep.subr.bf16.mxu0 0
      %495 = vmatpush1.bf16.msra.mxu0 %v426
      %496 = vmatprep.subr.bf16.mxu0 0
      %497 = vmatpush1.bf16.msra.mxu0 %v425
      %498 = vmatprep.subr.bf16.mxu0 0
      %499 = vmatpush2.bf16.msra.mxu0 %v440
      %500 = vmatprep.subr.bf16.mxu0 0
      %501 = vmatpush2.bf16.msra.mxu0 %v439
      %502 = vmatprep.subr.bf16.mxu0 0
      %503 = vmatpush2.bf16.msra.mxu0 %v438
      %504 = vmatprep.subr.bf16.mxu0 0
      %505 = vmatpush2.bf16.msra.mxu0 %v437
      %506 = vmatprep.subr.bf16.mxu0 0
      %507 = vmatpush2.bf16.msra.mxu0 %v436
      %508 = vmatprep.subr.bf16.mxu0 0
      %509 = vmatpush2.bf16.msra.mxu0 %v435
      %510 = vmatprep.subr.bf16.mxu0 0
      %511 = vmatpush2.bf16.msra.mxu0 %v434
      %512 = vmatprep.subr.bf16.mxu0 0
      %513 = vmatpush2.bf16.msra.mxu0 %v433
      %514 = vmatprep.mubr.bf16.mxu0 %v312
      %515 = vmatmul.mubr.bf16.gmra.mxu0 %v311
      %v516 = vpop.f32.mrf.mxu0
      %v517 = vadd.f32 %v270, %v516
      %v518 = vpop.f32.mrf.mxu0
      %v519 = vpop.f32.mrf.mxu0
      %v520 = vadd.f32 %v275, %v519
      %v521 = vpop.f32.mrf.mxu0
      %522 = vmatprep.mubr.bf16.mxu0 %v316
      %523 = vmatmul.mubr.bf16.gmra.mxu0 %v315
      %v524 = vpop.f32.mrf.mxu0
      %v525 = vadd.f32 %v280, %v524
      %v526 = vpop.f32.mrf.mxu0
      %v527 = vpop.f32.mrf.mxu0
      %v528 = vadd.f32 %v285, %v527
      %v529 = vpop.f32.mrf.mxu0
      %530 = vdwg.mxu0
      %531 = vmatprep.subr.bf16.mxu0 0
      %532 = vmatpush1.bf16.msra.mxu0 %v448
      %533 = vmatprep.subr.bf16.mxu0 0
      %534 = vmatpush1.bf16.msra.mxu0 %v447
      %535 = vmatprep.subr.bf16.mxu0 0
      %536 = vmatpush1.bf16.msra.mxu0 %v446
      %537 = vmatprep.subr.bf16.mxu0 0
      %538 = vmatpush1.bf16.msra.mxu0 %v445
      %539 = vmatprep.subr.bf16.mxu0 0
      %540 = vmatpush1.bf16.msra.mxu0 %v444
      %541 = vmatprep.subr.bf16.mxu0 0
      %542 = vmatpush1.bf16.msra.mxu0 %v443
      %543 = vmatprep.subr.bf16.mxu0 0
      %544 = vmatpush1.bf16.msra.mxu0 %v442
      %545 = vmatprep.subr.bf16.mxu0 0
      %546 = vmatpush1.bf16.msra.mxu0 %v441
      %547 = vmatprep.subr.bf16.mxu0 0
      %548 = vmatpush2.bf16.msra.mxu0 0
      %549 = vmatprep.subr.bf16.mxu0 0
      %550 = vmatpush2.bf16.msra.mxu0 0
      %551 = vmatprep.subr.bf16.mxu0 0
      %552 = vmatpush2.bf16.msra.mxu0 0
      %553 = vmatprep.subr.bf16.mxu0 0
      %554 = vmatpush2.bf16.msra.mxu0 0
      %555 = vmatprep.subr.bf16.mxu0 0
      %556 = vmatpush2.bf16.msra.mxu0 0
      %557 = vmatprep.subr.bf16.mxu0 0
      %558 = vmatpush2.bf16.msra.mxu0 0
      %559 = vmatprep.subr.bf16.mxu0 0
      %560 = vmatpush2.bf16.msra.mxu0 0
      %561 = vmatprep.subr.bf16.mxu0 0
      %562 = vmatpush2.bf16.msra.mxu0 %v449
      %563 = vmatprep.mubr.bf16.mxu0 %v477
      %564 = vmatmul.mubr.bf16.gmra.mxu0 %v313
      %v565 = vpop.f32.mrf.mxu0
      %v566 = vadd.f32 %v517, %v565
      %v567 = vpop.f32.mrf.mxu0
      %v568 = vpop.f32.mrf.mxu0
      %v569 = vadd.f32 %v520, %v568
      %v570 = vpop.f32.mrf.mxu0
      %571 = vmatprep.mubr.bf16.mxu0 %v480
      %572 = vmatmul.mubr.bf16.gmra.mxu0 %v317
      %v573 = vpop.f32.mrf.mxu0
      %v574 = vadd.f32 %v525, %v573
      %v575 = vpop.f32.mrf.mxu0
      %v576 = vpop.f32.mrf.mxu0
      %v577 = vadd.f32 %v528, %v576
      %v578 = vpop.f32.mrf.mxu0
      %579 = vdwg.mxu0
      %v580 = vmax.f32 %v566, 0.0
      %v581 = vmax.f32 %v569, 0.0
      %v582 = vmax.f32 %v574, 0.0
      %v583 = vmax.f32 %v577, 0.0
      %v584 = vlaneseq
      %v585 = vand.u32 %v584, 127
      %s586 = smul.u32 %s19, 16
      %s587 = ssub.s32 16, %s586
      %v588 = vstv %s587
      %vm589 = vcmp.lt.s32.totalorder %v585, %v588
      %v590 = vsel %vm589, %v580, 0.0
      %v591 = vsel %vm589, %v581, 0.0
      %v592 = vsel %vm589, %v582, 0.0
      %v593 = vsel %vm589, %v583, 0.0
      %v594 = vsel %vm475, %v590, 0.0
      %595 = vadd.xlane.f32.xlu0 %v594
      %v596 = vpop.xlane.xlu0 %595
      %v597 = vsel %vm475, %v591, 0.0
      %598 = vadd.xlane.f32.xlu0 %v597
      %v599 = vpop.xlane.xlu0 %598
      %v600 = vsel %vm475, %v592, 0.0
      %601 = vadd.xlane.f32.xlu0 %v600
      %v602 = vpop.xlane.xlu0 %601
      %v603 = vsel %vm475, %v593, 0.0
      %604 = vadd.xlane.f32.xlu0 %v603
      %v605 = vpop.xlane.xlu0 %604
      %v606 = vmul.f32 %v590, %v590
      %v607 = vmul.f32 %v591, %v591
      %v608 = vmul.f32 %v592, %v592
      %v609 = vmul.f32 %v593, %v593
      %v610 = vsel %vm475, %v606, 0.0
      %611 = vadd.xlane.f32.xlu0 %v610
      %v612 = vpop.xlane.xlu0 %611
      %v613 = vsel %vm475, %v607, 0.0
      %614 = vadd.xlane.f32.xlu0 %v613
      %v615 = vpop.xlane.xlu0 %614
      %v616 = vsel %vm475, %v608, 0.0
      %617 = vadd.xlane.f32.xlu0 %v616
      %v618 = vpop.xlane.xlu0 %617
      %v619 = vsel %vm475, %v609, 0.0
      %620 = vadd.xlane.f32.xlu0 %v619
      %v621 = vpop.xlane.xlu0 %620
      %vm622 = vcmask 7168
      %v623 = vsel %vm622, %v596, %v612
      %v624 = vsel %vm622, %v599, %v615
      %v625 = vsel %vm622, %v602, %v618
      %v626 = vsel %vm622, %v605, %v621
      %vm627 = vcmask 15360
      %628 = vst.msk [vmem:[%s203] sm:$0xff] %vm627, %v623
      %629 = vst.msk [vmem:[%s203 + $0x8] sm:$0xff] %vm627, %v624
      %630 = vst.msk [vmem:[%s203 + $0x10] sm:$0xff] %vm627, %v625
      %631 = vst.msk [vmem:[%s203 + $0x18] sm:$0xff] %vm627, %v626
      %p632 = scmp.lt.s32.totalorder %s18, 1
      %s633 = scalar_select %p632, %s18, 1
      %p634 = scmp.lt.s32.totalorder %s19, 0
      %s635 = scalar_select %p634, %s19, 0
      %s636 = smul.addr %s635, 4
      %s637 = smul.addr %s633, 4
      %s638 = sadd.s32 %s636, %s637
      %s639 = smul.addr %s638, 8
      %s640 = scalar_lea.vmem %s3, %s639
      // Predicated region
      $region33: #{contrastive_forward.6} parent=31 // pred_check
        %p641 = pneg %p116
      $region34: #{contrastive_forward.6} parent=31 // pred_check_branch
        %643 = sbr.rel (%p641) target = $region36
      $region35: #{contrastive_forward.6} parent=31 // pred_region
        _
      $region36: #{contrastive_forward.6} parent=31 // pred_fallthru
        _
    $region32: #{contrastive_forward.6} parent=5 // pred_fallthru
      _
    %p644 = scmp.le.s32.totalorder 2, %s9
    // Predicated region
    $region37: #{contrastive_forward.6} parent=5 // pred_check
      %p645 = pneg %p644
    $region38: #{contrastive_forward.6} parent=5 // pred_check_branch
      %647 = sbr.rel (%p645) target = $region40
    $region39: #{contrastive_forward.6} parent=5 // pred_region
      %s648 = ssub.s32 %s9, 2
      // Predicated region
      $region41: #{contrastive_forward.6} parent=39 // pred_check
        %p649 = pneg %p122
      $region42: #{contrastive_forward.6} parent=39 // pred_check_branch
        %651 = sbr.rel (%p649) target = $region44
      $region43: #{contrastive_forward.6} parent=39 // pred_region
        %p652 = scmp.lt.s32.totalorder %s20, 1
        %s653 = scalar_select %p652, %s20, 1
        %p654 = scmp.lt.s32.totalorder %s21, 0
        %s655 = scalar_select %p654, %s21, 0
        %s656 = smul.addr %s655, 4
        %s657 = smul.addr %s653, 4
        %s658 = sadd.s32 %s656, %s657
        %s659 = smul.addr %s658, 8
        %s660 = scalar_lea.vmem %s3, %s659
      $region44: #{contrastive_forward.6} parent=39 // pred_fallthru
        _
    $region40: #{contrastive_forward.6} parent=5 // pred_fallthru
      _
  $region6: #{contrastive_forward.6} parent=0 // loop_footer
    %s13 = sadd.s32 1, %s9
  $region7: #{contrastive_forward.6} parent=0 // loop_footer_branch
    %8 = sbr.rel target = $region3
  $region8: #{contrastive_forward.6} parent=0 // loop_exit
    _

</llo_original>
